<compile_context>
chip_gen: v7x
topology: tpu7x:2x2x1
jax: 0.10.0
libtpu: 0.0.40
codegen_flags: <defaults>
</compile_context>

<pallas_src>
import functools

import jax
import jax.numpy as jnp
from jax.experimental import pallas as pl
from jax.experimental.pallas import tpu as pltpu


# ----------------------------------------------------------------------------
# Kernels
# ----------------------------------------------------------------------------
def _encoder_layer_kernel(src_ref, pos_ref, bias_ref,
                          wq_ref, wk_ref, wv_ref, bq_ref, bk_ref, bv_ref,
                          wo_ref, bo_ref,
                          w1_ref, b1_ref, w2_ref, b2_ref,
                          g1_ref, be1_ref, g2_ref, be2_ref,
                          out_ref, *, nhead: int, eps: float):
    """One DETR TransformerEncoderLayer (post-norm) for one batch element."""
    S, D = src_ref.shape
    hd = D // nhead
    scale = 1.0 / float(hd) ** 0.5

    src = src_ref[...].astype(jnp.float32)          # [S, D]
    pos = pos_ref[...].astype(jnp.float32)          # [S, D]
    bias = bias_ref[...].astype(jnp.float32)        # [S, S] additive attention bias

    qk_in = src + pos                               # with_pos_embed(src, pos)

    q = jnp.dot(qk_in, wq_ref[...], preferred_element_type=jnp.float32) + bq_ref[...]
    k = jnp.dot(qk_in, wk_ref[...], preferred_element_type=jnp.float32) + bk_ref[...]
    v = jnp.dot(src,   wv_ref[...], preferred_element_type=jnp.float32) + bv_ref[...]

    # static unroll over heads (nhead is small); everything stays in vregs/VMEM
    head_outs = []
    for h in range(nhead):
        qh = q[:, h * hd:(h + 1) * hd]
        kh = k[:, h * hd:(h + 1) * hd]
        vh = v[:, h * hd:(h + 1) * hd]
        sc = jnp.einsum('qd,kd->qk', qh, kh,
                        preferred_element_type=jnp.float32) * scale + bias
        m = jnp.max(sc, axis=-1, keepdims=True)
        e = jnp.exp(sc - m)
        p = e / jnp.sum(e, axis=-1, keepdims=True)
        head_outs.append(jnp.dot(p, vh, preferred_element_type=jnp.float32))
    attn = jnp.concatenate(head_outs, axis=-1)      # [S, D]
    attn = jnp.dot(attn, wo_ref[...], preferred_element_type=jnp.float32) + bo_ref[...]

    # residual + LayerNorm 1   (dropout == identity in eval mode)
    x = src + attn
    mu = jnp.mean(x, axis=-1, keepdims=True)
    xc = x - mu
    var = jnp.mean(xc * xc, axis=-1, keepdims=True)
    x = xc * jax.lax.rsqrt(var + eps) * g1_ref[...] + be1_ref[...]

    # feed-forward: linear1 -> ReLU -> linear2
    h1 = jnp.dot(x, w1_ref[...], preferred_element_type=jnp.float32) + b1_ref[...]
    h1 = jnp.maximum(h1, 0.0)
    ffn = jnp.dot(h1, w2_ref[...], preferred_element_type=jnp.float32) + b2_ref[...]

    # residual + LayerNorm 2
    y = x + ffn
    mu2 = jnp.mean(y, axis=-1, keepdims=True)
    yc = y - mu2
    var2 = jnp.mean(yc * yc, axis=-1, keepdims=True)
    y = yc * jax.lax.rsqrt(var2 + eps) * g2_ref[...] + be2_ref[...]

    out_ref[...] = y.astype(out_ref.dtype)


def _layernorm_kernel(x_ref, g_ref, b_ref, out_ref, *, eps: float):
    x = x_ref[...].astype(jnp.float32)
    mu = jnp.mean(x, axis=-1, keepdims=True)
    xc = x - mu
    var = jnp.mean(xc * xc, axis=-1, keepdims=True)
    out_ref[...] = (xc * jax.lax.rsqrt(var + eps) * g_ref[...] + b_ref[...]
                    ).astype(out_ref.dtype)


# ----------------------------------------------------------------------------
# Wrapper
# ----------------------------------------------------------------------------
def _build_attn_bias(B, S, src_mask, key_padding_mask):
    """Combined additive attention bias [B, S, S] from src_mask / key padding."""
    bias = jnp.zeros((B, S, S), jnp.float32)
    if src_mask is not None:
        bias = bias + src_mask.astype(jnp.float32)[None, :, :]
    if key_padding_mask is not None:
        bias = bias + jnp.where(key_padding_mask[:, None, :], -1e9, 0.0)
    return bias


def transformer_encoder(src, layer_params, *, mask=None, src_key_padding_mask=None,
                        pos=None, final_norm=None, nhead=4, eps=1e-5):
    """
    src                  : [S, B, D]   (seq-first, PyTorch layout)
    mask                 : [S, S] additive float mask or None
    src_key_padding_mask : [B, S] bool or None (True = padded)
    pos                  : [S, B, D] or None
    layer_params         : list of dicts holding PyTorch-shaped weights per layer
    final_norm           : (weight[D], bias[D]) or None
    returns              : [S, B, D]
    """
    S, B, D = src.shape
    if pos is None:
        pos = jnp.zeros_like(src)

    # single small transpose to batch-first so each grid step sees a lane-dense
    # [S, D] slab; layers then run back-to-back with no intermediate HBM reshapes
    x = jnp.transpose(src, (1, 0, 2))        # [B, S, D]
    pos_b = jnp.transpose(pos, (1, 0, 2))    # [B, S, D]
    bias = _build_attn_bias(B, S, mask, src_key_padding_mask)

    def _wspec(shape):
        return pl.BlockSpec(shape, lambda b, _n=len(shape): (0,) * _n)

    act_spec = pl.BlockSpec((None, S, D), lambda b: (b, 0, 0))
    bias_spec = pl.BlockSpec((None, S, S), lambda b: (b, 0, 0))

    for p in layer_params:
        w_in, b_in = p['in_proj_w'], p['in_proj_b']
        FF = p['lin1_w'].shape[0]
        args = (
            x, pos_b, bias,
            # weights re-oriented once on the host to "x @ W" form
            w_in[0:D, :].T, w_in[D:2 * D, :].T, w_in[2 * D:3 * D, :].T,
            b_in[0:D].reshape(1, D), b_in[D:2 * D].reshape(1, D),
            b_in[2 * D:3 * D].reshape(1, D),
            p['out_w'].T, p['out_b'].reshape(1, D),
            p['lin1_w'].T, p['lin1_b'].reshape(1, FF),
            p['lin2_w'].T, p['lin2_b'].reshape(1, D),
            p['norm1_w'].reshape(1, D), p['norm1_b'].reshape(1, D),
            p['norm2_w'].reshape(1, D), p['norm2_b'].reshape(1, D),
        )
        in_specs = [act_spec, act_spec, bias_spec] + [_wspec(a.shape) for a in args[3:]]
        x = pl.pallas_call(
            functools.partial(_encoder_layer_kernel, nhead=nhead, eps=eps),
            out_shape=jax.ShapeDtypeStruct((B, S, D), src.dtype),
            grid_spec=pltpu.PrefetchScalarGridSpec(
                num_scalar_prefetch=0,
                grid=(B,),
                in_specs=in_specs,
                out_specs=act_spec,
            ),
            compiler_params=pltpu.CompilerParams(
                dimension_semantics=("parallel",)),
        )(*args)

    if final_norm is not None:
        g, b = final_norm
        x = pl.pallas_call(
            functools.partial(_layernorm_kernel, eps=eps),
            out_shape=jax.ShapeDtypeStruct((B, S, D), src.dtype),
            grid_spec=pltpu.PrefetchScalarGridSpec(
                num_scalar_prefetch=0,
                grid=(B,),
                in_specs=[act_spec, _wspec((1, D)), _wspec((1, D))],
                out_specs=act_spec,
            ),
            compiler_params=pltpu.CompilerParams(
                dimension_semantics=("parallel",)),
        )(x, g.reshape(1, D), b.reshape(1, D))

    return jnp.transpose(x, (1, 0, 2))       # back to [S, B, D]


# ----------------------------------------------------------------------------
# Pure-JAX reference (mirrors PyTorch TransformerEncoder of DETR post-norm layers)
# ----------------------------------------------------------------------------
def _ln_ref(x, w, b, eps):
    mu = jnp.mean(x, axis=-1, keepdims=True)
    xc = x - mu
    var = jnp.mean(xc * xc, axis=-1, keepdims=True)
    return xc * jax.lax.rsqrt(var + eps) * w + b


def _reference(src, layer_params, *, mask=None, src_key_padding_mask=None,
               pos=None, final_norm=None, nhead=4, eps=1e-5):
    S, B, D = src.shape
    hd = D // nhead
    hp = jax.lax.Precision.HIGHEST
    if pos is None:
        pos = jnp.zeros_like(src)
    bias = _build_attn_bias(B, S, mask, src_key_padding_mask)   # [B, S, S]
    x = src
    for p in layer_params:
        w_in, b_in = p['in_proj_w'], p['in_proj_b']
        qk_in = x + pos
        q = jnp.einsum('sbd,ed->sbe', qk_in, w_in[0:D], precision=hp) + b_in[0:D]
        k = jnp.einsum('sbd,ed->sbe', qk_in, w_in[D:2 * D], precision=hp) + b_in[D:2 * D]
        v = jnp.einsum('sbd,ed->sbe', x, w_in[2 * D:], precision=hp) + b_in[2 * D:]

        def split(t):
            return jnp.transpose(t.reshape(S, B, nhead, hd), (1, 2, 0, 3))  # [B,h,S,hd]
        qh, kh, vh = split(q), split(k), split(v)
        sc = jnp.einsum('bhqd,bhkd->bhqk', qh, kh, precision=hp) / float(hd) ** 0.5
        sc = sc + bias[:, None, :, :]
        m = jnp.max(sc, axis=-1, keepdims=True)
        e = jnp.exp(sc - m)
        a = e / jnp.sum(e, axis=-1, keepdims=True)
        o = jnp.einsum('bhqk,bhkd->bhqd', a, vh, precision=hp)
        o = jnp.transpose(o, (2, 0, 1, 3)).reshape(S, B, D)
        attn = jnp.einsum('sbd,ed->sbe', o, p['out_w'], precision=hp) + p['out_b']

        x = _ln_ref(x + attn, p['norm1_w'], p['norm1_b'], eps)
        h1 = jnp.maximum(
            jnp.einsum('sbd,fd->sbf', x, p['lin1_w'], precision=hp) + p['lin1_b'], 0.0)
        ffn = jnp.einsum('sbf,df->sbd', h1, p['lin2_w'], precision=hp) + p['lin2_b']
        x = _ln_ref(x + ffn, p['norm2_w'], p['norm2_b'], eps)
    if final_norm is not None:
        x = _ln_ref(x, final_norm[0], final_norm[1], eps)
    return x


if __name__ == "__main__":
    S, B, D = 16, 2, 32            # seq, batch, d_model
    NHEAD, FF, NUM_LAYERS = 4, 64, 2

    key = jax.random.PRNGKey(0)

    def nrm(k, shape, scale=0.1):
        return scale * jax.random.normal(k, shape, dtype=jnp.float32)

    layer_params = []
    for _ in range(NUM_LAYERS):
        key, *ks = jax.random.split(key, 13)
        layer_params.append(dict(
            in_proj_w=nrm(ks[0], (3 * D, D)),
            in_proj_b=nrm(ks[1], (3 * D,)),
            out_w=nrm(ks[2], (D, D)),
            out_b=nrm(ks[3], (D,)),
            lin1_w=nrm(ks[4], (FF, D)),
            lin1_b=nrm(ks[5], (FF,)),
            lin2_w=nrm(ks[6], (D, FF)),
            lin2_b=nrm(ks[7], (D,)),
            norm1_w=1.0 + nrm(ks[8], (D,)),
            norm1_b=nrm(ks[9], (D,)),
            norm2_w=1.0 + nrm(ks[10], (D,)),
            norm2_b=nrm(ks[11], (D,)),
        ))

    key, k_src, k_pos, k_fn1, k_fn2 = jax.random.split(key, 5)
    src = jax.random.normal(k_src, (S, B, D), dtype=jnp.float32)
    pos = jax.random.normal(k_pos, (S, B, D), dtype=jnp.float32)
    final_norm = (1.0 + nrm(k_fn1, (D,)), nrm(k_fn2, (D,)))

    # key padding mask: batch element 1 has its last 3 positions padded
    kpm = jnp.zeros((B, S), dtype=bool).at[1, S - 3:].set(True)

    out = transformer_encoder(src, layer_params,
                              src_key_padding_mask=kpm, pos=pos,
                              final_norm=final_norm, nhead=NHEAD)
    out = jax.block_until_ready(out)

    ref = _reference(src, layer_params,
                     src_key_padding_mask=kpm, pos=pos,
                     final_norm=final_norm, nhead=NHEAD)

    assert out.shape == (S, B, D), out.shape
    assert jnp.allclose(out, ref, atol=1e-2, rtol=1e-2), \
        float(jnp.max(jnp.abs(out - ref)))

    print("KERNEL_OK")
</pallas_src>

<mosaic_0001>
module attributes {stable_mosaic.version = 11 : i64} {
  func.func @_encoder_layer_kernel(%arg0: i32, %arg1: memref<1x16x32xf32, #tpu.memory_space<vmem>>, %arg2: memref<1x16x32xf32, #tpu.memory_space<vmem>>, %arg3: memref<1x16x16xf32, #tpu.memory_space<vmem>>, %arg4: memref<32x32xf32, #tpu.memory_space<vmem>>, %arg5: memref<32x32xf32, #tpu.memory_space<vmem>>, %arg6: memref<32x32xf32, #tpu.memory_space<vmem>>, %arg7: memref<1x32xf32, #tpu.memory_space<vmem>>, %arg8: memref<1x32xf32, #tpu.memory_space<vmem>>, %arg9: memref<1x32xf32, #tpu.memory_space<vmem>>, %arg10: memref<32x32xf32, #tpu.memory_space<vmem>>, %arg11: memref<1x32xf32, #tpu.memory_space<vmem>>, %arg12: memref<32x64xf32, #tpu.memory_space<vmem>>, %arg13: memref<1x64xf32, #tpu.memory_space<vmem>>, %arg14: memref<64x32xf32, #tpu.memory_space<vmem>>, %arg15: memref<1x32xf32, #tpu.memory_space<vmem>>, %arg16: memref<1x32xf32, #tpu.memory_space<vmem>>, %arg17: memref<1x32xf32, #tpu.memory_space<vmem>>, %arg18: memref<1x32xf32, #tpu.memory_space<vmem>>, %arg19: memref<1x32xf32, #tpu.memory_space<vmem>>, %arg20: memref<1x16x32xf32, #tpu.memory_space<vmem>>) attributes {dimension_semantics = [#tpu.dimension_semantics<parallel>], iteration_bounds = array<i64: 2>, scalar_prefetch = 0 : i64, scratch_operands = 0 : i64, tpu.core_type = #tpu.core_type<tc>, window_params = [{transform_indices = @transform_0, window_bounds = array<i64: 1, 16, 32>}, {transform_indices = @transform_1, window_bounds = array<i64: 1, 16, 32>}, {transform_indices = @transform_2, window_bounds = array<i64: 1, 16, 16>}, {pipeline_mode = #tpu.pipeline_mode<synchronous>, transform_indices = @transform_3, window_bounds = array<i64: 32, 32>}, {pipeline_mode = #tpu.pipeline_mode<synchronous>, transform_indices = @transform_4, window_bounds = array<i64: 32, 32>}, {pipeline_mode = #tpu.pipeline_mode<synchronous>, transform_indices = @transform_5, window_bounds = array<i64: 32, 32>}, {pipeline_mode = #tpu.pipeline_mode<synchronous>, transform_indices = @transform_6, window_bounds = array<i64: 1, 32>}, {pipeline_mode = #tpu.pipeline_mode<synchronous>, transform_indices = @transform_7, window_bounds = array<i64: 1, 32>}, {pipeline_mode = #tpu.pipeline_mode<synchronous>, transform_indices = @transform_8, window_bounds = array<i64: 1, 32>}, {pipeline_mode = #tpu.pipeline_mode<synchronous>, transform_indices = @transform_9, window_bounds = array<i64: 32, 32>}, {pipeline_mode = #tpu.pipeline_mode<synchronous>, transform_indices = @transform_10, window_bounds = array<i64: 1, 32>}, {pipeline_mode = #tpu.pipeline_mode<synchronous>, transform_indices = @transform_11, window_bounds = array<i64: 32, 64>}, {pipeline_mode = #tpu.pipeline_mode<synchronous>, transform_indices = @transform_12, window_bounds = array<i64: 1, 64>}, {pipeline_mode = #tpu.pipeline_mode<synchronous>, transform_indices = @transform_13, window_bounds = array<i64: 64, 32>}, {pipeline_mode = #tpu.pipeline_mode<synchronous>, transform_indices = @transform_14, window_bounds = array<i64: 1, 32>}, {pipeline_mode = #tpu.pipeline_mode<synchronous>, transform_indices = @transform_15, window_bounds = array<i64: 1, 32>}, {pipeline_mode = #tpu.pipeline_mode<synchronous>, transform_indices = @transform_16, window_bounds = array<i64: 1, 32>}, {pipeline_mode = #tpu.pipeline_mode<synchronous>, transform_indices = @transform_17, window_bounds = array<i64: 1, 32>}, {pipeline_mode = #tpu.pipeline_mode<synchronous>, transform_indices = @transform_18, window_bounds = array<i64: 1, 32>}, {transform_indices = @transform_19, window_bounds = array<i64: 1, 16, 32>}]} {
    %c0 = arith.constant 0 : index
    %c0_0 = arith.constant 0 : index
    %c0_1 = arith.constant 0 : index
    %0 = vector.load %arg1[%c0, %c0_0, %c0_1] : memref<1x16x32xf32, #tpu.memory_space<vmem>>, vector<1x16x32xf32>
    %1 = vector.shape_cast %0 : vector<1x16x32xf32> to vector<16x32xf32>
    %c0_2 = arith.constant 0 : index
    %c0_3 = arith.constant 0 : index
    %c0_4 = arith.constant 0 : index
    %2 = vector.load %arg2[%c0_2, %c0_3, %c0_4] : memref<1x16x32xf32, #tpu.memory_space<vmem>>, vector<1x16x32xf32>
    %3 = vector.shape_cast %2 : vector<1x16x32xf32> to vector<16x32xf32>
    %c0_5 = arith.constant 0 : index
    %c0_6 = arith.constant 0 : index
    %c0_7 = arith.constant 0 : index
    %4 = vector.load %arg3[%c0_5, %c0_6, %c0_7] : memref<1x16x16xf32, #tpu.memory_space<vmem>>, vector<1x16x16xf32>
    %5 = vector.shape_cast %4 : vector<1x16x16xf32> to vector<16x16xf32>
    %6 = arith.addf %1, %3 : vector<16x32xf32>
    %c0_8 = arith.constant 0 : index
    %c0_9 = arith.constant 0 : index
    %7 = vector.load %arg4[%c0_8, %c0_9] : memref<32x32xf32, #tpu.memory_space<vmem>>, vector<32x32xf32>
    %cst = arith.constant dense<0.000000e+00> : vector<16x32xf32>
    %8 = tpu.matmul %6, %7, %cst {dimension_numbers = #tpu.dot_dimension_numbers<[1], [0], [0], [1], [0, 0, 1, 1], [], []>} : vector<16x32xf32>, vector<32x32xf32>, vector<16x32xf32> -> vector<16x32xf32>
    %c0_10 = arith.constant 0 : index
    %c0_11 = arith.constant 0 : index
    %9 = vector.load %arg7[%c0_10, %c0_11] : memref<1x32xf32, #tpu.memory_space<vmem>>, vector<1x32xf32>
    %10 = vector.broadcast %9 : vector<1x32xf32> to vector<16x32xf32>
    %11 = arith.addf %8, %10 : vector<16x32xf32>
    %c0_12 = arith.constant 0 : index
    %c0_13 = arith.constant 0 : index
    %12 = vector.load %arg5[%c0_12, %c0_13] : memref<32x32xf32, #tpu.memory_space<vmem>>, vector<32x32xf32>
    %cst_14 = arith.constant dense<0.000000e+00> : vector<16x32xf32>
    %13 = tpu.matmul %6, %12, %cst_14 {dimension_numbers = #tpu.dot_dimension_numbers<[1], [0], [0], [1], [0, 0, 1, 1], [], []>} : vector<16x32xf32>, vector<32x32xf32>, vector<16x32xf32> -> vector<16x32xf32>
    %c0_15 = arith.constant 0 : index
    %c0_16 = arith.constant 0 : index
    %14 = vector.load %arg8[%c0_15, %c0_16] : memref<1x32xf32, #tpu.memory_space<vmem>>, vector<1x32xf32>
    %15 = vector.broadcast %14 : vector<1x32xf32> to vector<16x32xf32>
    %16 = arith.addf %13, %15 : vector<16x32xf32>
    %c0_17 = arith.constant 0 : index
    %c0_18 = arith.constant 0 : index
    %17 = vector.load %arg6[%c0_17, %c0_18] : memref<32x32xf32, #tpu.memory_space<vmem>>, vector<32x32xf32>
    %cst_19 = arith.constant dense<0.000000e+00> : vector<16x32xf32>
    %18 = tpu.matmul %1, %17, %cst_19 {dimension_numbers = #tpu.dot_dimension_numbers<[1], [0], [0], [1], [0, 0, 1, 1], [], []>} : vector<16x32xf32>, vector<32x32xf32>, vector<16x32xf32> -> vector<16x32xf32>
    %c0_20 = arith.constant 0 : index
    %c0_21 = arith.constant 0 : index
    %19 = vector.load %arg9[%c0_20, %c0_21] : memref<1x32xf32, #tpu.memory_space<vmem>>, vector<1x32xf32>
    %20 = vector.broadcast %19 : vector<1x32xf32> to vector<16x32xf32>
    %21 = arith.addf %18, %20 : vector<16x32xf32>
    %22 = vector.extract_strided_slice %11 {offsets = [0, 0], sizes = [16, 8], strides = [1, 1]} : vector<16x32xf32> to vector<16x8xf32>
    %23 = vector.extract_strided_slice %16 {offsets = [0, 0], sizes = [16, 8], strides = [1, 1]} : vector<16x32xf32> to vector<16x8xf32>
    %24 = vector.extract_strided_slice %21 {offsets = [0, 0], sizes = [16, 8], strides = [1, 1]} : vector<16x32xf32> to vector<16x8xf32>
    "tpu.trace_start"() <{level = 10 : i32, message = "qd,kd->qk"}> : () -> ()
    %cst_22 = arith.constant dense<0.000000e+00> : vector<16x16xf32>
    %25 = tpu.matmul %22, %23, %cst_22 {dimension_numbers = #tpu.dot_dimension_numbers<[1], [1], [0], [0], [0, 0, 1, 0], [], []>} : vector<16x8xf32>, vector<16x8xf32>, vector<16x16xf32> -> vector<16x16xf32>
    "tpu.trace_stop"() : () -> ()
    %cst_23 = arith.constant 0.353553385 : f32
    %26 = vector.broadcast %cst_23 : f32 to vector<16x16xf32>
    %27 = arith.mulf %25, %26 : vector<16x16xf32>
    %28 = arith.addf %27, %5 : vector<16x16xf32>
    %cst_24 = arith.constant dense<0xFF800000> : vector<16xf32>
    %29 = vector.multi_reduction <maximumf>, %28, %cst_24 [1] : vector<16x16xf32> to vector<16xf32>
    %30 = vector.shape_cast %29 : vector<16xf32> to vector<16x1xf32>
    %31 = vector.broadcast %30 : vector<16x1xf32> to vector<16x16xf32>
    %32 = arith.subf %28, %31 : vector<16x16xf32>
    %33 = math.exp %32 : vector<16x16xf32>
    %cst_25 = arith.constant dense<0.000000e+00> : vector<16xf32>
    %34 = vector.multi_reduction <add>, %33, %cst_25 [1] : vector<16x16xf32> to vector<16xf32>
    %35 = vector.shape_cast %34 : vector<16xf32> to vector<16x1xf32>
    %36 = vector.broadcast %35 : vector<16x1xf32> to vector<16x16xf32>
    %37 = arith.divf %33, %36 : vector<16x16xf32>
    %cst_26 = arith.constant dense<0.000000e+00> : vector<16x8xf32>
    %38 = tpu.matmul %37, %24, %cst_26 {dimension_numbers = #tpu.dot_dimension_numbers<[1], [0], [0], [1], [0, 0, 1, 1], [], []>} : vector<16x16xf32>, vector<16x8xf32>, vector<16x8xf32> -> vector<16x8xf32>
    %39 = vector.extract_strided_slice %11 {offsets = [0, 8], sizes = [16, 8], strides = [1, 1]} : vector<16x32xf32> to vector<16x8xf32>
    %40 = vector.extract_strided_slice %16 {offsets = [0, 8], sizes = [16, 8], strides = [1, 1]} : vector<16x32xf32> to vector<16x8xf32>
    %41 = vector.extract_strided_slice %21 {offsets = [0, 8], sizes = [16, 8], strides = [1, 1]} : vector<16x32xf32> to vector<16x8xf32>
    "tpu.trace_start"() <{level = 10 : i32, message = "qd,kd->qk"}> : () -> ()
    %cst_27 = arith.constant dense<0.000000e+00> : vector<16x16xf32>
    %42 = tpu.matmul %39, %40, %cst_27 {dimension_numbers = #tpu.dot_dimension_numbers<[1], [1], [0], [0], [0, 0, 1, 0], [], []>} : vector<16x8xf32>, vector<16x8xf32>, vector<16x16xf32> -> vector<16x16xf32>
    "tpu.trace_stop"() : () -> ()
    %cst_28 = arith.constant 0.353553385 : f32
    %43 = vector.broadcast %cst_28 : f32 to vector<16x16xf32>
    %44 = arith.mulf %42, %43 : vector<16x16xf32>
    %45 = arith.addf %44, %5 : vector<16x16xf32>
    %cst_29 = arith.constant dense<0xFF800000> : vector<16xf32>
    %46 = vector.multi_reduction <maximumf>, %45, %cst_29 [1] : vector<16x16xf32> to vector<16xf32>
    %47 = vector.shape_cast %46 : vector<16xf32> to vector<16x1xf32>
    %48 = vector.broadcast %47 : vector<16x1xf32> to vector<16x16xf32>
    %49 = arith.subf %45, %48 : vector<16x16xf32>
    %50 = math.exp %49 : vector<16x16xf32>
    %cst_30 = arith.constant dense<0.000000e+00> : vector<16xf32>
    %51 = vector.multi_reduction <add>, %50, %cst_30 [1] : vector<16x16xf32> to vector<16xf32>
    %52 = vector.shape_cast %51 : vector<16xf32> to vector<16x1xf32>
    %53 = vector.broadcast %52 : vector<16x1xf32> to vector<16x16xf32>
    %54 = arith.divf %50, %53 : vector<16x16xf32>
    %cst_31 = arith.constant dense<0.000000e+00> : vector<16x8xf32>
    %55 = tpu.matmul %54, %41, %cst_31 {dimension_numbers = #tpu.dot_dimension_numbers<[1], [0], [0], [1], [0, 0, 1, 1], [], []>} : vector<16x16xf32>, vector<16x8xf32>, vector<16x8xf32> -> vector<16x8xf32>
    %56 = vector.extract_strided_slice %11 {offsets = [0, 16], sizes = [16, 8], strides = [1, 1]} : vector<16x32xf32> to vector<16x8xf32>
    %57 = vector.extract_strided_slice %16 {offsets = [0, 16], sizes = [16, 8], strides = [1, 1]} : vector<16x32xf32> to vector<16x8xf32>
    %58 = vector.extract_strided_slice %21 {offsets = [0, 16], sizes = [16, 8], strides = [1, 1]} : vector<16x32xf32> to vector<16x8xf32>
    "tpu.trace_start"() <{level = 10 : i32, message = "qd,kd->qk"}> : () -> ()
    %cst_32 = arith.constant dense<0.000000e+00> : vector<16x16xf32>
    %59 = tpu.matmul %56, %57, %cst_32 {dimension_numbers = #tpu.dot_dimension_numbers<[1], [1], [0], [0], [0, 0, 1, 0], [], []>} : vector<16x8xf32>, vector<16x8xf32>, vector<16x16xf32> -> vector<16x16xf32>
    "tpu.trace_stop"() : () -> ()
    %cst_33 = arith.constant 0.353553385 : f32
    %60 = vector.broadcast %cst_33 : f32 to vector<16x16xf32>
    %61 = arith.mulf %59, %60 : vector<16x16xf32>
    %62 = arith.addf %61, %5 : vector<16x16xf32>
    %cst_34 = arith.constant dense<0xFF800000> : vector<16xf32>
    %63 = vector.multi_reduction <maximumf>, %62, %cst_34 [1] : vector<16x16xf32> to vector<16xf32>
    %64 = vector.shape_cast %63 : vector<16xf32> to vector<16x1xf32>
    %65 = vector.broadcast %64 : vector<16x1xf32> to vector<16x16xf32>
    %66 = arith.subf %62, %65 : vector<16x16xf32>
    %67 = math.exp %66 : vector<16x16xf32>
    %cst_35 = arith.constant dense<0.000000e+00> : vector<16xf32>
    %68 = vector.multi_reduction <add>, %67, %cst_35 [1] : vector<16x16xf32> to vector<16xf32>
    %69 = vector.shape_cast %68 : vector<16xf32> to vector<16x1xf32>
    %70 = vector.broadcast %69 : vector<16x1xf32> to vector<16x16xf32>
    %71 = arith.divf %67, %70 : vector<16x16xf32>
    %cst_36 = arith.constant dense<0.000000e+00> : vector<16x8xf32>
    %72 = tpu.matmul %71, %58, %cst_36 {dimension_numbers = #tpu.dot_dimension_numbers<[1], [0], [0], [1], [0, 0, 1, 1], [], []>} : vector<16x16xf32>, vector<16x8xf32>, vector<16x8xf32> -> vector<16x8xf32>
    %73 = vector.extract_strided_slice %11 {offsets = [0, 24], sizes = [16, 8], strides = [1, 1]} : vector<16x32xf32> to vector<16x8xf32>
    %74 = vector.extract_strided_slice %16 {offsets = [0, 24], sizes = [16, 8], strides = [1, 1]} : vector<16x32xf32> to vector<16x8xf32>
    %75 = vector.extract_strided_slice %21 {offsets = [0, 24], sizes = [16, 8], strides = [1, 1]} : vector<16x32xf32> to vector<16x8xf32>
    "tpu.trace_start"() <{level = 10 : i32, message = "qd,kd->qk"}> : () -> ()
    %cst_37 = arith.constant dense<0.000000e+00> : vector<16x16xf32>
    %76 = tpu.matmul %73, %74, %cst_37 {dimension_numbers = #tpu.dot_dimension_numbers<[1], [1], [0], [0], [0, 0, 1, 0], [], []>} : vector<16x8xf32>, vector<16x8xf32>, vector<16x16xf32> -> vector<16x16xf32>
    "tpu.trace_stop"() : () -> ()
    %cst_38 = arith.constant 0.353553385 : f32
    %77 = vector.broadcast %cst_38 : f32 to vector<16x16xf32>
    %78 = arith.mulf %76, %77 : vector<16x16xf32>
    %79 = arith.addf %78, %5 : vector<16x16xf32>
    %cst_39 = arith.constant dense<0xFF800000> : vector<16xf32>
    %80 = vector.multi_reduction <maximumf>, %79, %cst_39 [1] : vector<16x16xf32> to vector<16xf32>
    %81 = vector.shape_cast %80 : vector<16xf32> to vector<16x1xf32>
    %82 = vector.broadcast %81 : vector<16x1xf32> to vector<16x16xf32>
    %83 = arith.subf %79, %82 : vector<16x16xf32>
    %84 = math.exp %83 : vector<16x16xf32>
    %cst_40 = arith.constant dense<0.000000e+00> : vector<16xf32>
    %85 = vector.multi_reduction <add>, %84, %cst_40 [1] : vector<16x16xf32> to vector<16xf32>
    %86 = vector.shape_cast %85 : vector<16xf32> to vector<16x1xf32>
    %87 = vector.broadcast %86 : vector<16x1xf32> to vector<16x16xf32>
    %88 = arith.divf %84, %87 : vector<16x16xf32>
    %cst_41 = arith.constant dense<0.000000e+00> : vector<16x8xf32>
    %89 = tpu.matmul %88, %75, %cst_41 {dimension_numbers = #tpu.dot_dimension_numbers<[1], [0], [0], [1], [0, 0, 1, 1], [], []>} : vector<16x16xf32>, vector<16x8xf32>, vector<16x8xf32> -> vector<16x8xf32>
    %90 = tpu.concatenate %38, %55, %72, %89 in 1 : vector<16x8xf32>, vector<16x8xf32>, vector<16x8xf32>, vector<16x8xf32> -> vector<16x32xf32>
    %c0_42 = arith.constant 0 : index
    %c0_43 = arith.constant 0 : index
    %91 = vector.load %arg10[%c0_42, %c0_43] : memref<32x32xf32, #tpu.memory_space<vmem>>, vector<32x32xf32>
    %cst_44 = arith.constant dense<0.000000e+00> : vector<16x32xf32>
    %92 = tpu.matmul %90, %91, %cst_44 {dimension_numbers = #tpu.dot_dimension_numbers<[1], [0], [0], [1], [0, 0, 1, 1], [], []>} : vector<16x32xf32>, vector<32x32xf32>, vector<16x32xf32> -> vector<16x32xf32>
    %c0_45 = arith.constant 0 : index
    %c0_46 = arith.constant 0 : index
    %93 = vector.load %arg11[%c0_45, %c0_46] : memref<1x32xf32, #tpu.memory_space<vmem>>, vector<1x32xf32>
    %94 = vector.broadcast %93 : vector<1x32xf32> to vector<16x32xf32>
    %95 = arith.addf %92, %94 : vector<16x32xf32>
    %96 = arith.addf %1, %95 : vector<16x32xf32>
    %cst_47 = arith.constant dense<0.000000e+00> : vector<16xf32>
    %97 = vector.multi_reduction <add>, %96, %cst_47 [1] : vector<16x32xf32> to vector<16xf32>
    %98 = vector.shape_cast %97 : vector<16xf32> to vector<16x1xf32>
    %cst_48 = arith.constant 3.200000e+01 : f32
    %99 = vector.broadcast %cst_48 : f32 to vector<16x1xf32>
    %100 = arith.divf %98, %99 : vector<16x1xf32>
    %101 = vector.broadcast %100 : vector<16x1xf32> to vector<16x32xf32>
    %102 = arith.subf %96, %101 : vector<16x32xf32>
    %103 = arith.mulf %102, %102 : vector<16x32xf32>
    %cst_49 = arith.constant dense<0.000000e+00> : vector<16xf32>
    %104 = vector.multi_reduction <add>, %103, %cst_49 [1] : vector<16x32xf32> to vector<16xf32>
    %105 = vector.shape_cast %104 : vector<16xf32> to vector<16x1xf32>
    %cst_50 = arith.constant 3.200000e+01 : f32
    %106 = vector.broadcast %cst_50 : f32 to vector<16x1xf32>
    %107 = arith.divf %105, %106 : vector<16x1xf32>
    %cst_51 = arith.constant 9.99999974E-6 : f32
    %108 = vector.broadcast %cst_51 : f32 to vector<16x1xf32>
    %109 = arith.addf %107, %108 : vector<16x1xf32>
    %110 = math.rsqrt %109 : vector<16x1xf32>
    %111 = vector.broadcast %110 : vector<16x1xf32> to vector<16x32xf32>
    %112 = arith.mulf %102, %111 : vector<16x32xf32>
    %c0_52 = arith.constant 0 : index
    %c0_53 = arith.constant 0 : index
    %113 = vector.load %arg16[%c0_52, %c0_53] : memref<1x32xf32, #tpu.memory_space<vmem>>, vector<1x32xf32>
    %114 = vector.broadcast %113 : vector<1x32xf32> to vector<16x32xf32>
    %115 = arith.mulf %112, %114 : vector<16x32xf32>
    %c0_54 = arith.constant 0 : index
    %c0_55 = arith.constant 0 : index
    %116 = vector.load %arg17[%c0_54, %c0_55] : memref<1x32xf32, #tpu.memory_space<vmem>>, vector<1x32xf32>
    %117 = vector.broadcast %116 : vector<1x32xf32> to vector<16x32xf32>
    %118 = arith.addf %115, %117 : vector<16x32xf32>
    %c0_56 = arith.constant 0 : index
    %c0_57 = arith.constant 0 : index
    %119 = vector.load %arg12[%c0_56, %c0_57] : memref<32x64xf32, #tpu.memory_space<vmem>>, vector<32x64xf32>
    %cst_58 = arith.constant dense<0.000000e+00> : vector<16x64xf32>
    %120 = tpu.matmul %118, %119, %cst_58 {dimension_numbers = #tpu.dot_dimension_numbers<[1], [0], [0], [1], [0, 0, 1, 1], [], []>} : vector<16x32xf32>, vector<32x64xf32>, vector<16x64xf32> -> vector<16x64xf32>
    %c0_59 = arith.constant 0 : index
    %c0_60 = arith.constant 0 : index
    %121 = vector.load %arg13[%c0_59, %c0_60] : memref<1x64xf32, #tpu.memory_space<vmem>>, vector<1x64xf32>
    %122 = vector.broadcast %121 : vector<1x64xf32> to vector<16x64xf32>
    %123 = arith.addf %120, %122 : vector<16x64xf32>
    %cst_61 = arith.constant 0.000000e+00 : f32
    %124 = vector.broadcast %cst_61 : f32 to vector<16x64xf32>
    %125 = arith.maximumf %123, %124 : vector<16x64xf32>
    %c0_62 = arith.constant 0 : index
    %c0_63 = arith.constant 0 : index
    %126 = vector.load %arg14[%c0_62, %c0_63] : memref<64x32xf32, #tpu.memory_space<vmem>>, vector<64x32xf32>
    %cst_64 = arith.constant dense<0.000000e+00> : vector<16x32xf32>
    %127 = tpu.matmul %125, %126, %cst_64 {dimension_numbers = #tpu.dot_dimension_numbers<[1], [0], [0], [1], [0, 0, 1, 1], [], []>} : vector<16x64xf32>, vector<64x32xf32>, vector<16x32xf32> -> vector<16x32xf32>
    %c0_65 = arith.constant 0 : index
    %c0_66 = arith.constant 0 : index
    %128 = vector.load %arg15[%c0_65, %c0_66] : memref<1x32xf32, #tpu.memory_space<vmem>>, vector<1x32xf32>
    %129 = vector.broadcast %128 : vector<1x32xf32> to vector<16x32xf32>
    %130 = arith.addf %127, %129 : vector<16x32xf32>
    %131 = arith.addf %118, %130 : vector<16x32xf32>
    %cst_67 = arith.constant dense<0.000000e+00> : vector<16xf32>
    %132 = vector.multi_reduction <add>, %131, %cst_67 [1] : vector<16x32xf32> to vector<16xf32>
    %133 = vector.shape_cast %132 : vector<16xf32> to vector<16x1xf32>
    %cst_68 = arith.constant 3.200000e+01 : f32
    %134 = vector.broadcast %cst_68 : f32 to vector<16x1xf32>
    %135 = arith.divf %133, %134 : vector<16x1xf32>
    %136 = vector.broadcast %135 : vector<16x1xf32> to vector<16x32xf32>
    %137 = arith.subf %131, %136 : vector<16x32xf32>
    %138 = arith.mulf %137, %137 : vector<16x32xf32>
    %cst_69 = arith.constant dense<0.000000e+00> : vector<16xf32>
    %139 = vector.multi_reduction <add>, %138, %cst_69 [1] : vector<16x32xf32> to vector<16xf32>
    %140 = vector.shape_cast %139 : vector<16xf32> to vector<16x1xf32>
    %cst_70 = arith.constant 3.200000e+01 : f32
    %141 = vector.broadcast %cst_70 : f32 to vector<16x1xf32>
    %142 = arith.divf %140, %141 : vector<16x1xf32>
    %cst_71 = arith.constant 9.99999974E-6 : f32
    %143 = vector.broadcast %cst_71 : f32 to vector<16x1xf32>
    %144 = arith.addf %142, %143 : vector<16x1xf32>
    %145 = math.rsqrt %144 : vector<16x1xf32>
    %146 = vector.broadcast %145 : vector<16x1xf32> to vector<16x32xf32>
    %147 = arith.mulf %137, %146 : vector<16x32xf32>
    %c0_72 = arith.constant 0 : index
    %c0_73 = arith.constant 0 : index
    %148 = vector.load %arg18[%c0_72, %c0_73] : memref<1x32xf32, #tpu.memory_space<vmem>>, vector<1x32xf32>
    %149 = vector.broadcast %148 : vector<1x32xf32> to vector<16x32xf32>
    %150 = arith.mulf %147, %149 : vector<16x32xf32>
    %c0_74 = arith.constant 0 : index
    %c0_75 = arith.constant 0 : index
    %151 = vector.load %arg19[%c0_74, %c0_75] : memref<1x32xf32, #tpu.memory_space<vmem>>, vector<1x32xf32>
    %152 = vector.broadcast %151 : vector<1x32xf32> to vector<16x32xf32>
    %153 = arith.addf %150, %152 : vector<16x32xf32>
    %c0_76 = arith.constant 0 : index
    %c0_77 = arith.constant 0 : index
    %c0_78 = arith.constant 0 : index
    %154 = vector.load %arg20[%c0_76, %c0_77, %c0_78] : memref<1x16x32xf32, #tpu.memory_space<vmem>>, vector<1x16x32xf32>
    %155 = vector.shape_cast %154 : vector<1x16x32xf32> to vector<16x32xf32>
    %156 = vector.shape_cast %153 : vector<16x32xf32> to vector<1x16x32xf32>
    tpu.vector_store %arg20[%c0_76, %c0_77, %c0_78], %156 {strides = array<i32>} : memref<1x16x32xf32, #tpu.memory_space<vmem>>, vector<1x16x32xf32>,
    return
  }
  func.func @transform_0(%arg0: i32) -> (i32, i32, i32) {
    %c0_i32 = arith.constant 0 : i32
    %c0_i32_0 = arith.constant 0 : i32
    %c0_i32_1 = arith.constant 0 : i32
    return %arg0, %c0_i32, %c0_i32_0 : i32, i32, i32
  }
  func.func @transform_1(%arg0: i32) -> (i32, i32, i32) {
    %c0_i32 = arith.constant 0 : i32
    %c0_i32_0 = arith.constant 0 : i32
    %c0_i32_1 = arith.constant 0 : i32
    return %arg0, %c0_i32, %c0_i32_0 : i32, i32, i32
  }
  func.func @transform_2(%arg0: i32) -> (i32, i32, i32) {
    %c0_i32 = arith.constant 0 : i32
    %c0_i32_0 = arith.constant 0 : i32
    %c0_i32_1 = arith.constant 0 : i32
    return %arg0, %c0_i32, %c0_i32_0 : i32, i32, i32
  }
  func.func @transform_3(%arg0: i32) -> (i32, i32) {
    %c0_i32 = arith.constant 0 : i32
    %c0_i32_0 = arith.constant 0 : i32
    %c0_i32_1 = arith.constant 0 : i32
    return %c0_i32, %c0_i32_0 : i32, i32
  }
  func.func @transform_4(%arg0: i32) -> (i32, i32) {
    %c0_i32 = arith.constant 0 : i32
    %c0_i32_0 = arith.constant 0 : i32
    %c0_i32_1 = arith.constant 0 : i32
    return %c0_i32, %c0_i32_0 : i32, i32
  }
  func.func @transform_5(%arg0: i32) -> (i32, i32) {
    %c0_i32 = arith.constant 0 : i32
    %c0_i32_0 = arith.constant 0 : i32
    %c0_i32_1 = arith.constant 0 : i32
    return %c0_i32, %c0_i32_0 : i32, i32
  }
  func.func @transform_6(%arg0: i32) -> (i32, i32) {
    %c0_i32 = arith.constant 0 : i32
    %c0_i32_0 = arith.constant 0 : i32
    %c0_i32_1 = arith.constant 0 : i32
    return %c0_i32, %c0_i32_0 : i32, i32
  }
  func.func @transform_7(%arg0: i32) -> (i32, i32) {
    %c0_i32 = arith.constant 0 : i32
    %c0_i32_0 = arith.constant 0 : i32
    %c0_i32_1 = arith.constant 0 : i32
    return %c0_i32, %c0_i32_0 : i32, i32
  }
  func.func @transform_8(%arg0: i32) -> (i32, i32) {
    %c0_i32 = arith.constant 0 : i32
    %c0_i32_0 = arith.constant 0 : i32
    %c0_i32_1 = arith.constant 0 : i32
    return %c0_i32, %c0_i32_0 : i32, i32
  }
  func.func @transform_9(%arg0: i32) -> (i32, i32) {
    %c0_i32 = arith.constant 0 : i32
    %c0_i32_0 = arith.constant 0 : i32
    %c0_i32_1 = arith.constant 0 : i32
    return %c0_i32, %c0_i32_0 : i32, i32
  }
  func.func @transform_10(%arg0: i32) -> (i32, i32) {
    %c0_i32 = arith.constant 0 : i32
    %c0_i32_0 = arith.constant 0 : i32
    %c0_i32_1 = arith.constant 0 : i32
    return %c0_i32, %c0_i32_0 : i32, i32
  }
  func.func @transform_11(%arg0: i32) -> (i32, i32) {
    %c0_i32 = arith.constant 0 : i32
    %c0_i32_0 = arith.constant 0 : i32
    %c0_i32_1 = arith.constant 0 : i32
    return %c0_i32, %c0_i32_0 : i32, i32
  }
  func.func @transform_12(%arg0: i32) -> (i32, i32) {
    %c0_i32 = arith.constant 0 : i32
    %c0_i32_0 = arith.constant 0 : i32
    %c0_i32_1 = arith.constant 0 : i32
    return %c0_i32, %c0_i32_0 : i32, i32
  }
  func.func @transform_13(%arg0: i32) -> (i32, i32) {
    %c0_i32 = arith.constant 0 : i32
    %c0_i32_0 = arith.constant 0 : i32
    %c0_i32_1 = arith.constant 0 : i32
    return %c0_i32, %c0_i32_0 : i32, i32
  }
  func.func @transform_14(%arg0: i32) -> (i32, i32) {
    %c0_i32 = arith.constant 0 : i32
    %c0_i32_0 = arith.constant 0 : i32
    %c0_i32_1 = arith.constant 0 : i32
    return %c0_i32, %c0_i32_0 : i32, i32
  }
  func.func @transform_15(%arg0: i32) -> (i32, i32) {
    %c0_i32 = arith.constant 0 : i32
    %c0_i32_0 = arith.constant 0 : i32
    %c0_i32_1 = arith.constant 0 : i32
    return %c0_i32, %c0_i32_0 : i32, i32
  }
  func.func @transform_16(%arg0: i32) -> (i32, i32) {
    %c0_i32 = arith.constant 0 : i32
    %c0_i32_0 = arith.constant 0 : i32
    %c0_i32_1 = arith.constant 0 : i32
    return %c0_i32, %c0_i32_0 : i32, i32
  }
  func.func @transform_17(%arg0: i32) -> (i32, i32) {
    %c0_i32 = arith.constant 0 : i32
    %c0_i32_0 = arith.constant 0 : i32
    %c0_i32_1 = arith.constant 0 : i32
    return %c0_i32, %c0_i32_0 : i32, i32
  }
  func.func @transform_18(%arg0: i32) -> (i32, i32) {
    %c0_i32 = arith.constant 0 : i32
    %c0_i32_0 = arith.constant 0 : i32
    %c0_i32_1 = arith.constant 0 : i32
    return %c0_i32, %c0_i32_0 : i32, i32
  }
  func.func @transform_19(%arg0: i32) -> (i32, i32, i32) {
    %c0_i32 = arith.constant 0 : i32
    %c0_i32_0 = arith.constant 0 : i32
    %c0_i32_1 = arith.constant 0 : i32
    return %arg0, %c0_i32, %c0_i32_0 : i32, i32, i32
  }
}

</mosaic_0001>

<llo_original>
// kernel: tpu_custom_call.1
$region0: #{tpu_custom_call.1}
  #allocation0 [shape = 'u32[]', space=smem, size = 0x4, offset = 0x4, fixed_abs, tag = 'smem constant byte address 0x4 - core index']
  #allocation1 [shape = 'u32[144,128]{1,0:T(1,128)}', space=vmem, size = 0x12000, scoped, tag = 'internal scratch']
  %s0 = inlined_call_operand.vmem [shape: f32[2,16,32], index: 0, kind: input, shape index: {}]
  %s1 = inlined_call_operand.vmem [shape: f32[2,16,32], index: 1, kind: input, shape index: {}]
  %s2 = inlined_call_operand.vmem [shape: f32[2,16,16], index: 2, kind: input, shape index: {}]
  %s3 = inlined_call_operand.hbm [shape: f32[32,32], index: 3, kind: input, shape index: {}]
  %s4 = inlined_call_operand.hbm [shape: f32[32,32], index: 4, kind: input, shape index: {}]
  %s5 = inlined_call_operand.hbm [shape: f32[32,32], index: 5, kind: input, shape index: {}]
  %s6 = inlined_call_operand.vmem [shape: f32[1,32], index: 6, kind: input, shape index: {}]
  %s7 = inlined_call_operand.vmem [shape: f32[1,32], index: 7, kind: input, shape index: {}]
  %s8 = inlined_call_operand.vmem [shape: f32[1,32], index: 8, kind: input, shape index: {}]
  %s9 = inlined_call_operand.hbm [shape: f32[32,32], index: 9, kind: input, shape index: {}]
  %s10 = inlined_call_operand.vmem [shape: f32[1,32], index: 10, kind: input, shape index: {}]
  %s11 = inlined_call_operand.hbm [shape: f32[32,64], index: 11, kind: input, shape index: {}]
  %s12 = inlined_call_operand.vmem [shape: f32[1,64], index: 12, kind: input, shape index: {}]
  %s13 = inlined_call_operand.vmem [shape: f32[64,32], index: 13, kind: input, shape index: {}]
  %s14 = inlined_call_operand.vmem [shape: f32[1,32], index: 14, kind: input, shape index: {}]
  %s15 = inlined_call_operand.vmem [shape: f32[1,32], index: 15, kind: input, shape index: {}]
  %s16 = inlined_call_operand.vmem [shape: f32[1,32], index: 16, kind: input, shape index: {}]
  %s17 = inlined_call_operand.vmem [shape: f32[1,32], index: 17, kind: input, shape index: {}]
  %s18 = inlined_call_operand.vmem [shape: f32[1,32], index: 18, kind: input, shape index: {}]
  %s19 = inlined_call_operand.hbm [shape: f32[2,16,32], index: 19, kind: output, shape index: {}]
  %s20 = sld [smem:[#allocation0]]
  $region129: #{tpu_custom_call.1} parent=0
    _
  %s22 = ssub.s32 1, %s20
  %s23 = scalar_select 0, %s22, %s20
  $region1: #{tpu_custom_call.1} parent=0
    #allocation2 [shape = 'u8[16384]{0}', space=vmem, size = 0x4000, scoped, tag = 'input window, operand 3, single buffered']
    #allocation3 [shape = 's32[2]{0}', space=sflag, size = 0x8, scoped, tag = 'scoped memory for tpu_custom_call.1']
    #allocation4 [shape = 's32[2]{0}', space=sflag, size = 0x8, scoped, tag = 'scoped memory for tpu_custom_call.1']
    #allocation5 [shape = 'u8[16384]{0}', space=vmem, size = 0x4000, scoped, tag = 'input window, operand 4, single buffered']
    #allocation6 [shape = 's32[1]{0}', space=sflag, size = 0x4, scoped, tag = 'scoped memory for tpu_custom_call.1']
    #allocation7 [shape = 'u8[16384]{0}', space=vmem, size = 0x4000, scoped, tag = 'input window, operand 5, single buffered']
    #allocation8 [shape = 'u8[16384]{0}', space=vmem, size = 0x4000, scoped, tag = 'input window, operand 9, single buffered']
    #allocation9 [shape = 's32[1]{0}', space=sflag, size = 0x4, scoped, tag = 'scoped memory for tpu_custom_call.1']
    #allocation10 [shape = 'u8[16384]{0}', space=vmem, size = 0x4000, scoped, tag = 'input window, operand 11, single buffered']
    #allocation11 [shape = 'u8[16384]{0}', space=vmem, size = 0x4000, scoped, tag = 'output window, operand 0']
    %24 = vsyncpa [#allocation3], 0
    %25 = vsyncpa [#allocation6], 0
    %26 = vsyncpa [#allocation9], 0
    %27 = vsyncpa [#allocation4], 0
    %s28 = scalar_lea.sflag [#allocation4], 1
    %29 = vsyncpa %s28, 0
    loop: start=0, step=1, limit=4
    $region2: #{tpu_custom_call.1} parent=1 // loop_pre_header
      _
    $region3: #{tpu_custom_call.1} parent=1 // loop_header
      %s31 = sphi 0, %s35
      %p32 = scmp.ge.s32.totalorder %s31, 4
      %s41 = sphi 0, %s43
      %s44 = sphi 0, %s41
      %s45 = sphi 0, %s44
      %s61 = sphi 0, %s45
      %s67 = sphi 0, %s69
      %s70 = sphi 0, %s67
      %s71 = sphi 0, %s70
      %s87 = sphi 0, %s71
      %s93 = sphi 0, %s95
      %s96 = sphi 0, %s93
      %s97 = sphi 0, %s96
      %s113 = sphi 0, %s97
      %s117 = sphi 0, %s117
      %s119 = sphi 0, %s117
      %s120 = sphi 0, %s119
      %s134 = sphi 0, %s120
      %s138 = sphi 0, %s138
      %s140 = sphi 0, %s138
      %s141 = sphi 0, %s140
      %s155 = sphi 0, %s141
      %s159 = sphi 0, %s159
      %s161 = sphi 0, %s159
      %s162 = sphi 0, %s161
      %s176 = sphi 0, %s162
      %s180 = sphi 0, %s180
      %s182 = sphi 0, %s180
      %s183 = sphi 0, %s182
      %s197 = sphi 0, %s183
      %s201 = sphi 0, %s201
      %s203 = sphi 0, %s201
      %s204 = sphi 0, %s203
      %s218 = sphi 0, %s204
      %s222 = sphi 0, %s222
      %s224 = sphi 0, %s222
      %s225 = sphi 0, %s224
      %s239 = sphi 0, %s225
      %s243 = sphi 0, %s243
      %s245 = sphi 0, %s243
      %s246 = sphi 0, %s245
      %s260 = sphi 0, %s246
      %s264 = sphi 0, %s264
      %s266 = sphi 0, %s264
      %s267 = sphi 0, %s266
      %s281 = sphi 0, %s267
      %s285 = sphi 0, %s285
      %s287 = sphi 0, %s285
      %s288 = sphi 0, %s287
      %s302 = sphi 0, %s288
      %s306 = sphi 0, %s306
      %s308 = sphi 0, %s306
      %s309 = sphi 0, %s308
      %s323 = sphi 0, %s309
      %s327 = sphi 0, %s327
      %s329 = sphi 0, %s327
      %s330 = sphi 0, %s329
      %s344 = sphi 0, %s330
      %s348 = sphi 0, %s348
      %s350 = sphi 0, %s348
      %s351 = sphi 0, %s350
      %s365 = sphi 0, %s351
      %s369 = sphi 0, %s369
      %s371 = sphi 0, %s369
      %s372 = sphi 0, %s371
      %s386 = sphi 0, %s372
      %s390 = sphi 0, %s390
      %s392 = sphi 0, %s390
      %s393 = sphi 0, %s392
      %s407 = sphi 0, %s393
      %s411 = sphi 0, %s411
      %s413 = sphi 0, %s411
      %s414 = sphi 0, %s413
      %s428 = sphi 0, %s414
      %s432 = sphi 0, %s432
      %s434 = sphi 0, %s432
      %s435 = sphi 0, %s434
      %s449 = sphi 0, %s435
      %s455 = sphi 0, %s457
      %s458 = sphi 0, %s455
      %s459 = sphi 0, %s458
      %s475 = sphi 0, %s459
    $region4: #{tpu_custom_call.1} parent=1 // loop_header_branch
      %34 = sbr.rel (%p32) target = $region8
    $region5: #{tpu_custom_call.1} parent=1 // loop_body
      %s36 = ssub.s32 %s31, 1
      %s37 = ssub.s32 %s31, 2
      %s38 = sadd.s32 %s31, 1
      %s39 = ssub.s32 %s31, %s38
      %p40 = scmp.eq.s32.totalorder %s39, 0
      %s42 = sadd.s32 %s41, 1
      %s43 = scalar_select %p40, %s41, %s42
      %p46 = pneg %p40
      %p47 = scmp.eq.s32.totalorder %s31, 1
      %p48 = por %p46, %p47
      %p49 = scmp.ne.s32.totalorder %s41, %s44
      %p50 = scmp.eq.s32.totalorder %s31, 0
      %p51 = por %p49, %p50
      %p52 = scmp.ne.s32.totalorder %s41, %s44
      %p53 = scmp.eq.s32.totalorder %s36, 1
      %p54 = por %p52, %p53
      %p55 = scmp.ne.s32.totalorder %s44, %s45
      %p56 = scmp.eq.s32.totalorder %s36, 0
      %p57 = por %p55, %p56
      %p58 = scmp.ne.s32.totalorder %s44, %s45
      %p59 = scmp.eq.s32.totalorder %s37, 1
      %p60 = por %p58, %p59
      %p62 = scmp.ne.s32.totalorder %s45, %s61
      %p63 = scmp.eq.s32.totalorder %s37, 0
      %p64 = por %p62, %p63
      %s65 = ssub.s32 %s31, %s38
      %p66 = scmp.eq.s32.totalorder %s65, 0
      %s68 = sadd.s32 %s67, 1
      %s69 = scalar_select %p66, %s67, %s68
      %p72 = pneg %p66
      %p73 = scmp.eq.s32.totalorder %s31, 1
      %p74 = por %p72, %p73
      %p75 = scmp.ne.s32.totalorder %s67, %s70
      %p76 = scmp.eq.s32.totalorder %s31, 0
      %p77 = por %p75, %p76
      %p78 = scmp.ne.s32.totalorder %s67, %s70
      %p79 = scmp.eq.s32.totalorder %s36, 1
      %p80 = por %p78, %p79
      %p81 = scmp.ne.s32.totalorder %s70, %s71
      %p82 = scmp.eq.s32.totalorder %s36, 0
      %p83 = por %p81, %p82
      %p84 = scmp.ne.s32.totalorder %s70, %s71
      %p85 = scmp.eq.s32.totalorder %s37, 1
      %p86 = por %p84, %p85
      %p88 = scmp.ne.s32.totalorder %s71, %s87
      %p89 = scmp.eq.s32.totalorder %s37, 0
      %p90 = por %p88, %p89
      %s91 = ssub.s32 %s31, %s38
      %p92 = scmp.eq.s32.totalorder %s91, 0
      %s94 = sadd.s32 %s93, 1
      %s95 = scalar_select %p92, %s93, %s94
      %p98 = pneg %p92
      %p99 = scmp.eq.s32.totalorder %s31, 1
      %p100 = por %p98, %p99
      %p101 = scmp.ne.s32.totalorder %s93, %s96
      %p102 = scmp.eq.s32.totalorder %s31, 0
      %p103 = por %p101, %p102
      %p104 = scmp.ne.s32.totalorder %s93, %s96
      %p105 = scmp.eq.s32.totalorder %s36, 1
      %p106 = por %p104, %p105
      %p107 = scmp.ne.s32.totalorder %s96, %s97
      %p108 = scmp.eq.s32.totalorder %s36, 0
      %p109 = por %p107, %p108
      %p110 = scmp.ne.s32.totalorder %s96, %s97
      %p111 = scmp.eq.s32.totalorder %s37, 1
      %p112 = por %p110, %p111
      %p114 = scmp.ne.s32.totalorder %s97, %s113
      %p115 = scmp.eq.s32.totalorder %s37, 0
      %p116 = por %p114, %p115
      %s118 = sadd.s32 %s117, 1
      %p121 = scmp.eq.s32.totalorder %s31, 1
      %p122 = scmp.ne.s32.totalorder %s117, %s119
      %p123 = scmp.eq.s32.totalorder %s31, 0
      %p124 = por %p122, %p123
      %p125 = scmp.ne.s32.totalorder %s117, %s119
      %p126 = scmp.eq.s32.totalorder %s36, 1
      %p127 = por %p125, %p126
      %p128 = scmp.ne.s32.totalorder %s119, %s120
      %p129 = scmp.eq.s32.totalorder %s36, 0
      %p130 = por %p128, %p129
      %p131 = scmp.ne.s32.totalorder %s119, %s120
      %p132 = scmp.eq.s32.totalorder %s37, 1
      %p133 = por %p131, %p132
      %p135 = scmp.ne.s32.totalorder %s120, %s134
      %p136 = scmp.eq.s32.totalorder %s37, 0
      %p137 = por %p135, %p136
      %s139 = sadd.s32 %s138, 1
      %p142 = scmp.eq.s32.totalorder %s31, 1
      %p143 = scmp.ne.s32.totalorder %s138, %s140
      %p144 = scmp.eq.s32.totalorder %s31, 0
      %p145 = por %p143, %p144
      %p146 = scmp.ne.s32.totalorder %s138, %s140
      %p147 = scmp.eq.s32.totalorder %s36, 1
      %p148 = por %p146, %p147
      %p149 = scmp.ne.s32.totalorder %s140, %s141
      %p150 = scmp.eq.s32.totalorder %s36, 0
      %p151 = por %p149, %p150
      %p152 = scmp.ne.s32.totalorder %s140, %s141
      %p153 = scmp.eq.s32.totalorder %s37, 1
      %p154 = por %p152, %p153
      %p156 = scmp.ne.s32.totalorder %s141, %s155
      %p157 = scmp.eq.s32.totalorder %s37, 0
      %p158 = por %p156, %p157
      %s160 = sadd.s32 %s159, 1
      %p163 = scmp.eq.s32.totalorder %s31, 1
      %p164 = scmp.ne.s32.totalorder %s159, %s161
      %p165 = scmp.eq.s32.totalorder %s31, 0
      %p166 = por %p164, %p165
      %p167 = scmp.ne.s32.totalorder %s159, %s161
      %p168 = scmp.eq.s32.totalorder %s36, 1
      %p169 = por %p167, %p168
      %p170 = scmp.ne.s32.totalorder %s161, %s162
      %p171 = scmp.eq.s32.totalorder %s36, 0
      %p172 = por %p170, %p171
      %p173 = scmp.ne.s32.totalorder %s161, %s162
      %p174 = scmp.eq.s32.totalorder %s37, 1
      %p175 = por %p173, %p174
      %p177 = scmp.ne.s32.totalorder %s162, %s176
      %p178 = scmp.eq.s32.totalorder %s37, 0
      %p179 = por %p177, %p178
      %s181 = sadd.s32 %s180, 1
      %p184 = scmp.eq.s32.totalorder %s31, 1
      %p185 = scmp.ne.s32.totalorder %s180, %s182
      %p186 = scmp.eq.s32.totalorder %s31, 0
      %p187 = por %p185, %p186
      %p188 = scmp.ne.s32.totalorder %s180, %s182
      %p189 = scmp.eq.s32.totalorder %s36, 1
      %p190 = por %p188, %p189
      %p191 = scmp.ne.s32.totalorder %s182, %s183
      %p192 = scmp.eq.s32.totalorder %s36, 0
      %p193 = por %p191, %p192
      %p194 = scmp.ne.s32.totalorder %s182, %s183
      %p195 = scmp.eq.s32.totalorder %s37, 1
      %p196 = por %p194, %p195
      %p198 = scmp.ne.s32.totalorder %s183, %s197
      %p199 = scmp.eq.s32.totalorder %s37, 0
      %p200 = por %p198, %p199
      %s202 = sadd.s32 %s201, 1
      %p205 = scmp.eq.s32.totalorder %s31, 1
      %p206 = scmp.ne.s32.totalorder %s201, %s203
      %p207 = scmp.eq.s32.totalorder %s31, 0
      %p208 = por %p206, %p207
      %p209 = scmp.ne.s32.totalorder %s201, %s203
      %p210 = scmp.eq.s32.totalorder %s36, 1
      %p211 = por %p209, %p210
      %p212 = scmp.ne.s32.totalorder %s203, %s204
      %p213 = scmp.eq.s32.totalorder %s36, 0
      %p214 = por %p212, %p213
      %p215 = scmp.ne.s32.totalorder %s203, %s204
      %p216 = scmp.eq.s32.totalorder %s37, 1
      %p217 = por %p215, %p216
      %p219 = scmp.ne.s32.totalorder %s204, %s218
      %p220 = scmp.eq.s32.totalorder %s37, 0
      %p221 = por %p219, %p220
      %s223 = sadd.s32 %s222, 1
      %p226 = scmp.eq.s32.totalorder %s31, 1
      %p227 = scmp.ne.s32.totalorder %s222, %s224
      %p228 = scmp.eq.s32.totalorder %s31, 0
      %p229 = por %p227, %p228
      %p230 = scmp.ne.s32.totalorder %s222, %s224
      %p231 = scmp.eq.s32.totalorder %s36, 1
      %p232 = por %p230, %p231
      %p233 = scmp.ne.s32.totalorder %s224, %s225
      %p234 = scmp.eq.s32.totalorder %s36, 0
      %p235 = por %p233, %p234
      %p236 = scmp.ne.s32.totalorder %s224, %s225
      %p237 = scmp.eq.s32.totalorder %s37, 1
      %p238 = por %p236, %p237
      %p240 = scmp.ne.s32.totalorder %s225, %s239
      %p241 = scmp.eq.s32.totalorder %s37, 0
      %p242 = por %p240, %p241
      %s244 = sadd.s32 %s243, 1
      %p247 = scmp.eq.s32.totalorder %s31, 1
      %p248 = scmp.ne.s32.totalorder %s243, %s245
      %p249 = scmp.eq.s32.totalorder %s31, 0
      %p250 = por %p248, %p249
      %p251 = scmp.ne.s32.totalorder %s243, %s245
      %p252 = scmp.eq.s32.totalorder %s36, 1
      %p253 = por %p251, %p252
      %p254 = scmp.ne.s32.totalorder %s245, %s246
      %p255 = scmp.eq.s32.totalorder %s36, 0
      %p256 = por %p254, %p255
      %p257 = scmp.ne.s32.totalorder %s245, %s246
      %p258 = scmp.eq.s32.totalorder %s37, 1
      %p259 = por %p257, %p258
      %p261 = scmp.ne.s32.totalorder %s246, %s260
      %p262 = scmp.eq.s32.totalorder %s37, 0
      %p263 = por %p261, %p262
      %s265 = sadd.s32 %s264, 1
      %p268 = scmp.eq.s32.totalorder %s31, 1
      %p269 = scmp.ne.s32.totalorder %s264, %s266
      %p270 = scmp.eq.s32.totalorder %s31, 0
      %p271 = por %p269, %p270
      %p272 = scmp.ne.s32.totalorder %s264, %s266
      %p273 = scmp.eq.s32.totalorder %s36, 1
      %p274 = por %p272, %p273
      %p275 = scmp.ne.s32.totalorder %s266, %s267
      %p276 = scmp.eq.s32.totalorder %s36, 0
      %p277 = por %p275, %p276
      %p278 = scmp.ne.s32.totalorder %s266, %s267
      %p279 = scmp.eq.s32.totalorder %s37, 1
      %p280 = por %p278, %p279
      %p282 = scmp.ne.s32.totalorder %s267, %s281
      %p283 = scmp.eq.s32.totalorder %s37, 0
      %p284 = por %p282, %p283
      %s286 = sadd.s32 %s285, 1
      %p289 = scmp.eq.s32.totalorder %s31, 1
      %p290 = scmp.ne.s32.totalorder %s285, %s287
      %p291 = scmp.eq.s32.totalorder %s31, 0
      %p292 = por %p290, %p291
      %p293 = scmp.ne.s32.totalorder %s285, %s287
      %p294 = scmp.eq.s32.totalorder %s36, 1
      %p295 = por %p293, %p294
      %p296 = scmp.ne.s32.totalorder %s287, %s288
      %p297 = scmp.eq.s32.totalorder %s36, 0
      %p298 = por %p296, %p297
      %p299 = scmp.ne.s32.totalorder %s287, %s288
      %p300 = scmp.eq.s32.totalorder %s37, 1
      %p301 = por %p299, %p300
      %p303 = scmp.ne.s32.totalorder %s288, %s302
      %p304 = scmp.eq.s32.totalorder %s37, 0
      %p305 = por %p303, %p304
      %s307 = sadd.s32 %s306, 1
      %p310 = scmp.eq.s32.totalorder %s31, 1
      %p311 = scmp.ne.s32.totalorder %s306, %s308
      %p312 = scmp.eq.s32.totalorder %s31, 0
      %p313 = por %p311, %p312
      %p314 = scmp.ne.s32.totalorder %s306, %s308
      %p315 = scmp.eq.s32.totalorder %s36, 1
      %p316 = por %p314, %p315
      %p317 = scmp.ne.s32.totalorder %s308, %s309
      %p318 = scmp.eq.s32.totalorder %s36, 0
      %p319 = por %p317, %p318
      %p320 = scmp.ne.s32.totalorder %s308, %s309
      %p321 = scmp.eq.s32.totalorder %s37, 1
      %p322 = por %p320, %p321
      %p324 = scmp.ne.s32.totalorder %s309, %s323
      %p325 = scmp.eq.s32.totalorder %s37, 0
      %p326 = por %p324, %p325
      %s328 = sadd.s32 %s327, 1
      %p331 = scmp.eq.s32.totalorder %s31, 1
      %p332 = scmp.ne.s32.totalorder %s327, %s329
      %p333 = scmp.eq.s32.totalorder %s31, 0
      %p334 = por %p332, %p333
      %p335 = scmp.ne.s32.totalorder %s327, %s329
      %p336 = scmp.eq.s32.totalorder %s36, 1
      %p337 = por %p335, %p336
      %p338 = scmp.ne.s32.totalorder %s329, %s330
      %p339 = scmp.eq.s32.totalorder %s36, 0
      %p340 = por %p338, %p339
      %p341 = scmp.ne.s32.totalorder %s329, %s330
      %p342 = scmp.eq.s32.totalorder %s37, 1
      %p343 = por %p341, %p342
      %p345 = scmp.ne.s32.totalorder %s330, %s344
      %p346 = scmp.eq.s32.totalorder %s37, 0
      %p347 = por %p345, %p346
      %s349 = sadd.s32 %s348, 1
      %p352 = scmp.eq.s32.totalorder %s31, 1
      %p353 = scmp.ne.s32.totalorder %s348, %s350
      %p354 = scmp.eq.s32.totalorder %s31, 0
      %p355 = por %p353, %p354
      %p356 = scmp.ne.s32.totalorder %s348, %s350
      %p357 = scmp.eq.s32.totalorder %s36, 1
      %p358 = por %p356, %p357
      %p359 = scmp.ne.s32.totalorder %s350, %s351
      %p360 = scmp.eq.s32.totalorder %s36, 0
      %p361 = por %p359, %p360
      %p362 = scmp.ne.s32.totalorder %s350, %s351
      %p363 = scmp.eq.s32.totalorder %s37, 1
      %p364 = por %p362, %p363
      %p366 = scmp.ne.s32.totalorder %s351, %s365
      %p367 = scmp.eq.s32.totalorder %s37, 0
      %p368 = por %p366, %p367
      %s370 = sadd.s32 %s369, 1
      %p373 = scmp.eq.s32.totalorder %s31, 1
      %p374 = scmp.ne.s32.totalorder %s369, %s371
      %p375 = scmp.eq.s32.totalorder %s31, 0
      %p376 = por %p374, %p375
      %p377 = scmp.ne.s32.totalorder %s369, %s371
      %p378 = scmp.eq.s32.totalorder %s36, 1
      %p379 = por %p377, %p378
      %p380 = scmp.ne.s32.totalorder %s371, %s372
      %p381 = scmp.eq.s32.totalorder %s36, 0
      %p382 = por %p380, %p381
      %p383 = scmp.ne.s32.totalorder %s371, %s372
      %p384 = scmp.eq.s32.totalorder %s37, 1
      %p385 = por %p383, %p384
      %p387 = scmp.ne.s32.totalorder %s372, %s386
      %p388 = scmp.eq.s32.totalorder %s37, 0
      %p389 = por %p387, %p388
      %s391 = sadd.s32 %s390, 1
      %p394 = scmp.eq.s32.totalorder %s31, 1
      %p395 = scmp.ne.s32.totalorder %s390, %s392
      %p396 = scmp.eq.s32.totalorder %s31, 0
      %p397 = por %p395, %p396
      %p398 = scmp.ne.s32.totalorder %s390, %s392
      %p399 = scmp.eq.s32.totalorder %s36, 1
      %p400 = por %p398, %p399
      %p401 = scmp.ne.s32.totalorder %s392, %s393
      %p402 = scmp.eq.s32.totalorder %s36, 0
      %p403 = por %p401, %p402
      %p404 = scmp.ne.s32.totalorder %s392, %s393
      %p405 = scmp.eq.s32.totalorder %s37, 1
      %p406 = por %p404, %p405
      %p408 = scmp.ne.s32.totalorder %s393, %s407
      %p409 = scmp.eq.s32.totalorder %s37, 0
      %p410 = por %p408, %p409
      %s412 = sadd.s32 %s411, 1
      %p415 = scmp.eq.s32.totalorder %s31, 1
      %p416 = scmp.ne.s32.totalorder %s411, %s413
      %p417 = scmp.eq.s32.totalorder %s31, 0
      %p418 = por %p416, %p417
      %p419 = scmp.ne.s32.totalorder %s411, %s413
      %p420 = scmp.eq.s32.totalorder %s36, 1
      %p421 = por %p419, %p420
      %p422 = scmp.ne.s32.totalorder %s413, %s414
      %p423 = scmp.eq.s32.totalorder %s36, 0
      %p424 = por %p422, %p423
      %p425 = scmp.ne.s32.totalorder %s413, %s414
      %p426 = scmp.eq.s32.totalorder %s37, 1
      %p427 = por %p425, %p426
      %p429 = scmp.ne.s32.totalorder %s414, %s428
      %p430 = scmp.eq.s32.totalorder %s37, 0
      %p431 = por %p429, %p430
      %s433 = sadd.s32 %s432, 1
      %p436 = scmp.eq.s32.totalorder %s31, 1
      %p437 = scmp.ne.s32.totalorder %s432, %s434
      %p438 = scmp.eq.s32.totalorder %s31, 0
      %p439 = por %p437, %p438
      %p440 = scmp.ne.s32.totalorder %s432, %s434
      %p441 = scmp.eq.s32.totalorder %s36, 1
      %p442 = por %p440, %p441
      %p443 = scmp.ne.s32.totalorder %s434, %s435
      %p444 = scmp.eq.s32.totalorder %s36, 0
      %p445 = por %p443, %p444
      %p446 = scmp.ne.s32.totalorder %s434, %s435
      %p447 = scmp.eq.s32.totalorder %s37, 1
      %p448 = por %p446, %p447
      %p450 = scmp.ne.s32.totalorder %s435, %s449
      %p451 = scmp.eq.s32.totalorder %s37, 0
      %p452 = por %p450, %p451
      %s453 = ssub.s32 %s31, %s38
      %p454 = scmp.eq.s32.totalorder %s453, 0
      %s456 = sadd.s32 %s455, 1
      %s457 = scalar_select %p454, %s455, %s456
      %p460 = pneg %p454
      %p461 = scmp.eq.s32.totalorder %s31, 1
      %p462 = por %p460, %p461
      %p463 = scmp.ne.s32.totalorder %s455, %s458
      %p464 = scmp.eq.s32.totalorder %s31, 0
      %p465 = por %p463, %p464
      %p466 = scmp.ne.s32.totalorder %s455, %s458
      %p467 = scmp.eq.s32.totalorder %s36, 1
      %p468 = por %p466, %p467
      %p469 = scmp.ne.s32.totalorder %s458, %s459
      %p470 = scmp.eq.s32.totalorder %s36, 0
      %p471 = por %p469, %p470
      %p472 = scmp.ne.s32.totalorder %s458, %s459
      %p473 = scmp.eq.s32.totalorder %s37, 1
      %p474 = por %p472, %p473
      %p476 = scmp.ne.s32.totalorder %s459, %s475
      %p477 = scmp.eq.s32.totalorder %s37, 0
      %p478 = por %p476, %p477
      %p479 = scmp.le.s32.totalorder 1, %s31
      %p480 = scmp.lt.s32.totalorder %s31, 3
      %p481 = pnand %p479, %p480
      %p482 = pneg %p481
      // Predicated region
      $region9: #{tpu_custom_call.1} parent=5 // pred_check
        _
      $region10: #{tpu_custom_call.1} parent=5 // pred_check_branch
        %484 = sbr.rel (%p481) target = $region12
      $region11: #{tpu_custom_call.1} parent=5 // pred_region
        %s485 = ssub.s32 %s31, 1
        // Predicated region
        $region13: #{tpu_custom_call.1} parent=11 // pred_check
          %p486 = pneg %p130
        $region14: #{tpu_custom_call.1} parent=11 // pred_check_branch
          %488 = sbr.rel (%p486) target = $region16
        $region15: #{tpu_custom_call.1} parent=11 // pred_region
          %s490 = ssub.s32 512, 512
          %491 = vsyncadd [#allocation3], %s490
          %s492 = sshll.u32 [#allocation2], 4
          %s493 = int_to_ptr.vmem [resolvable:$true] %s492
          %498 = dma.hbm_to_vmem [thread:$0]  %s3, 512, %s493, [#allocation3], 128, 128, 8
        $region16: #{tpu_custom_call.1} parent=11 // pred_fallthru
          _
        // Predicated region
        $region17: #{tpu_custom_call.1} parent=11 // pred_check
          %p499 = pneg %p151
        $region18: #{tpu_custom_call.1} parent=11 // pred_check_branch
          %501 = sbr.rel (%p499) target = $region20
        $region19: #{tpu_custom_call.1} parent=11 // pred_region
          %s503 = ssub.s32 512, 512
          %504 = vsyncadd [#allocation6], %s503
          %s505 = sshll.u32 [#allocation5], 4
          %s506 = int_to_ptr.vmem [resolvable:$true] %s505
          %511 = dma.hbm_to_vmem [thread:$0]  %s4, 512, %s506, [#allocation6], 128, 128, 8
        $region20: #{tpu_custom_call.1} parent=11 // pred_fallthru
          _
        // Predicated region
        $region21: #{tpu_custom_call.1} parent=11 // pred_check
          %p512 = pneg %p172
        $region22: #{tpu_custom_call.1} parent=11 // pred_check_branch
          %514 = sbr.rel (%p512) target = $region24
        $region23: #{tpu_custom_call.1} parent=11 // pred_region
          %s516 = ssub.s32 512, 512
          %517 = vsyncadd [#allocation6], %s516
          %s518 = sshll.u32 [#allocation7], 4
          %s519 = int_to_ptr.vmem [resolvable:$true] %s518
          %524 = dma.hbm_to_vmem [thread:$0]  %s5, 512, %s519, [#allocation6], 128, 128, 8
        $region24: #{tpu_custom_call.1} parent=11 // pred_fallthru
          _
        // Predicated region
        $region25: #{tpu_custom_call.1} parent=11 // pred_check
          %p525 = pneg %p193
        $region26: #{tpu_custom_call.1} parent=11 // pred_check_branch
          %527 = sbr.rel (%p525) target = $region28
        $region27: #{tpu_custom_call.1} parent=11 // pred_region
          _
        $region28: #{tpu_custom_call.1} parent=11 // pred_fallthru
          _
        // Predicated region
        $region29: #{tpu_custom_call.1} parent=11 // pred_check
          %p528 = pneg %p214
        $region30: #{tpu_custom_call.1} parent=11 // pred_check_branch
          %530 = sbr.rel (%p528) target = $region32
        $region31: #{tpu_custom_call.1} parent=11 // pred_region
          _
        $region32: #{tpu_custom_call.1} parent=11 // pred_fallthru
          _
        // Predicated region
        $region33: #{tpu_custom_call.1} parent=11 // pred_check
          %p531 = pneg %p235
        $region34: #{tpu_custom_call.1} parent=11 // pred_check_branch
          %533 = sbr.rel (%p531) target = $region36
        $region35: #{tpu_custom_call.1} parent=11 // pred_region
          _
        $region36: #{tpu_custom_call.1} parent=11 // pred_fallthru
          _
        // Predicated region
        $region37: #{tpu_custom_call.1} parent=11 // pred_check
          %p534 = pneg %p256
        $region38: #{tpu_custom_call.1} parent=11 // pred_check_branch
          %536 = sbr.rel (%p534) target = $region40
        $region39: #{tpu_custom_call.1} parent=11 // pred_region
          %s538 = ssub.s32 512, 512
          %539 = vsyncadd [#allocation9], %s538
          %s540 = sshll.u32 [#allocation8], 4
          %s541 = int_to_ptr.vmem [resolvable:$true] %s540
          %546 = dma.hbm_to_vmem [thread:$0]  %s9, 512, %s541, [#allocation9], 128, 128, 8
        $region40: #{tpu_custom_call.1} parent=11 // pred_fallthru
          _
        // Predicated region
        $region41: #{tpu_custom_call.1} parent=11 // pred_check
          %p547 = pneg %p277
        $region42: #{tpu_custom_call.1} parent=11 // pred_check_branch
          %549 = sbr.rel (%p547) target = $region44
        $region43: #{tpu_custom_call.1} parent=11 // pred_region
          _
        $region44: #{tpu_custom_call.1} parent=11 // pred_fallthru
          _
        // Predicated region
        $region45: #{tpu_custom_call.1} parent=11 // pred_check
          %p550 = pneg %p298
        $region46: #{tpu_custom_call.1} parent=11 // pred_check_branch
          %552 = sbr.rel (%p550) target = $region48
        $region47: #{tpu_custom_call.1} parent=11 // pred_region
          %s554 = ssub.s32 512, 512
          %555 = vsyncadd [#allocation9], %s554
          %s556 = sshll.u32 [#allocation10], 4
          %s557 = int_to_ptr.vmem [resolvable:$true] %s556
          %562 = dma.hbm_to_vmem [thread:$0]  %s11, 512, %s557, [#allocation9], 128, 128, 8
        $region48: #{tpu_custom_call.1} parent=11 // pred_fallthru
          _
        // Predicated region
        $region49: #{tpu_custom_call.1} parent=11 // pred_check
          %p563 = pneg %p319
        $region50: #{tpu_custom_call.1} parent=11 // pred_check_branch
          %565 = sbr.rel (%p563) target = $region52
        $region51: #{tpu_custom_call.1} parent=11 // pred_region
          _
        $region52: #{tpu_custom_call.1} parent=11 // pred_fallthru
          _
        // Predicated region
        $region53: #{tpu_custom_call.1} parent=11 // pred_check
          %p566 = pneg %p340
        $region54: #{tpu_custom_call.1} parent=11 // pred_check_branch
          %568 = sbr.rel (%p566) target = $region56
        $region55: #{tpu_custom_call.1} parent=11 // pred_region
          _
        $region56: #{tpu_custom_call.1} parent=11 // pred_fallthru
          _
        // Predicated region
        $region57: #{tpu_custom_call.1} parent=11 // pred_check
          %p569 = pneg %p361
        $region58: #{tpu_custom_call.1} parent=11 // pred_check_branch
          %571 = sbr.rel (%p569) target = $region60
        $region59: #{tpu_custom_call.1} parent=11 // pred_region
          _
        $region60: #{tpu_custom_call.1} parent=11 // pred_fallthru
          _
        // Predicated region
        $region61: #{tpu_custom_call.1} parent=11 // pred_check
          %p572 = pneg %p382
        $region62: #{tpu_custom_call.1} parent=11 // pred_check_branch
          %574 = sbr.rel (%p572) target = $region64
        $region63: #{tpu_custom_call.1} parent=11 // pred_region
          _
        $region64: #{tpu_custom_call.1} parent=11 // pred_fallthru
          _
        // Predicated region
        $region65: #{tpu_custom_call.1} parent=11 // pred_check
          %p575 = pneg %p403
        $region66: #{tpu_custom_call.1} parent=11 // pred_check_branch
          %577 = sbr.rel (%p575) target = $region68
        $region67: #{tpu_custom_call.1} parent=11 // pred_region
          _
        $region68: #{tpu_custom_call.1} parent=11 // pred_fallthru
          _
        // Predicated region
        $region69: #{tpu_custom_call.1} parent=11 // pred_check
          %p578 = pneg %p424
        $region70: #{tpu_custom_call.1} parent=11 // pred_check_branch
          %580 = sbr.rel (%p578) target = $region72
        $region71: #{tpu_custom_call.1} parent=11 // pred_region
          _
        $region72: #{tpu_custom_call.1} parent=11 // pred_fallthru
          _
        // Predicated region
        $region73: #{tpu_custom_call.1} parent=11 // pred_check
          %p581 = pneg %p445
        $region74: #{tpu_custom_call.1} parent=11 // pred_check_branch
          %583 = sbr.rel (%p581) target = $region76
        $region75: #{tpu_custom_call.1} parent=11 // pred_region
          _
        $region76: #{tpu_custom_call.1} parent=11 // pred_fallthru
          _
      $region12: #{tpu_custom_call.1} parent=5 // pred_fallthru
        _
      %p584 = scmp.lt.s32.totalorder %s31, 2
      // Predicated region
      $region77: #{tpu_custom_call.1} parent=5 // pred_check
        %p585 = pneg %p584
      $region78: #{tpu_custom_call.1} parent=5 // pred_check_branch
        %587 = sbr.rel (%p585) target = $region80
      $region79: #{tpu_custom_call.1} parent=5 // pred_region
        // Predicated region
        $region81: #{tpu_custom_call.1} parent=79 // pred_check
          %p588 = pneg %p51
        $region82: #{tpu_custom_call.1} parent=79 // pred_check_branch
          %590 = sbr.rel (%p588) target = $region84
        $region83: #{tpu_custom_call.1} parent=79 // pred_region
          %p591 = scmp.lt.s32.totalorder %s31, 1
          %s592 = scalar_select %p591, %s31, 1
          %s593 = smul.addr %s592, 2
          %s594 = smul.addr %s593, 8
          %s595 = scalar_lea.vmem %s0, %s594
        $region84: #{tpu_custom_call.1} parent=79 // pred_fallthru
          _
        // Predicated region
        $region85: #{tpu_custom_call.1} parent=79 // pred_check
          %p596 = pneg %p77
        $region86: #{tpu_custom_call.1} parent=79 // pred_check_branch
          %598 = sbr.rel (%p596) target = $region88
        $region87: #{tpu_custom_call.1} parent=79 // pred_region
          %p599 = scmp.lt.s32.totalorder %s31, 1
          %s600 = scalar_select %p599, %s31, 1
          %s601 = smul.addr %s600, 2
          %s602 = smul.addr %s601, 8
          %s603 = scalar_lea.vmem %s1, %s602
        $region88: #{tpu_custom_call.1} parent=79 // pred_fallthru
          _
        // Predicated region
        $region89: #{tpu_custom_call.1} parent=79 // pred_check
          %p604 = pneg %p103
        $region90: #{tpu_custom_call.1} parent=79 // pred_check_branch
          %606 = sbr.rel (%p604) target = $region92
        $region91: #{tpu_custom_call.1} parent=79 // pred_region
          %p607 = scmp.lt.s32.totalorder %s31, 1
          %s608 = scalar_select %p607, %s31, 1
          %s609 = smul.addr %s608, 2
          %s610 = smul.addr %s609, 8
          %s611 = scalar_lea.vmem %s2, %s610
        $region92: #{tpu_custom_call.1} parent=79 // pred_fallthru
          _
      $region80: #{tpu_custom_call.1} parent=5 // pred_fallthru
        _
      %p612 = scmp.le.s32.totalorder 1, %s31
      %p613 = scmp.lt.s32.totalorder %s31, 3
      %p614 = pnand %p612, %p613
      %p615 = pneg %p614
      // Predicated region
      $region93: #{tpu_custom_call.1} parent=5 // pred_check
        _
      $region94: #{tpu_custom_call.1} parent=5 // pred_check_branch
        %617 = sbr.rel (%p614) target = $region96
      $region95: #{tpu_custom_call.1} parent=5 // pred_region
        %s618 = ssub.s32 %s31, 1
        // Predicated region
        $region97: #{tpu_custom_call.1} parent=95 // pred_check
          %p619 = pneg %p130
        $region98: #{tpu_custom_call.1} parent=95 // pred_check_branch
          %621 = sbr.rel (%p619) target = $region100
        $region99: #{tpu_custom_call.1} parent=95 // pred_region
          %622 = dma.done [#allocation3], 512
        $region100: #{tpu_custom_call.1} parent=95 // pred_fallthru
          _
        // Predicated region
        $region101: #{tpu_custom_call.1} parent=95 // pred_check
          %p623 = pneg %p151
        $region102: #{tpu_custom_call.1} parent=95 // pred_check_branch
          %625 = sbr.rel (%p623) target = $region104
        $region103: #{tpu_custom_call.1} parent=95 // pred_region
          %626 = dma.done [#allocation6], 512
        $region104: #{tpu_custom_call.1} parent=95 // pred_fallthru
          _
        // Predicated region
        $region105: #{tpu_custom_call.1} parent=95 // pred_check
          %p627 = pneg %p172
        $region106: #{tpu_custom_call.1} parent=95 // pred_check_branch
          %629 = sbr.rel (%p627) target = $region108
        $region107: #{tpu_custom_call.1} parent=95 // pred_region
          %630 = dma.done [#allocation6], 512
        $region108: #{tpu_custom_call.1} parent=95 // pred_fallthru
          _
        // Predicated region
        $region109: #{tpu_custom_call.1} parent=95 // pred_check
          %p631 = pneg %p256
        $region110: #{tpu_custom_call.1} parent=95 // pred_check_branch
          %633 = sbr.rel (%p631) target = $region112
        $region111: #{tpu_custom_call.1} parent=95 // pred_region
          %634 = dma.done [#allocation9], 512
        $region112: #{tpu_custom_call.1} parent=95 // pred_fallthru
          _
        // Predicated region
        $region113: #{tpu_custom_call.1} parent=95 // pred_check
          %p635 = pneg %p298
        $region114: #{tpu_custom_call.1} parent=95 // pred_check_branch
          %637 = sbr.rel (%p635) target = $region116
        $region115: #{tpu_custom_call.1} parent=95 // pred_region
          %638 = dma.done [#allocation9], 512
        $region116: #{tpu_custom_call.1} parent=95 // pred_fallthru
          _
        %p639 = scmp.lt.s32.totalorder %s36, 1
        %s640 = scalar_select %p639, %s36, 1
        %s641 = smul.addr %s640, 2
        %s642 = smul.addr %s641, 8
        %s643 = scalar_lea.vmem %s0, %s642
        %p644 = pneg %p57
        %p645 = pneg %p54
        %p646 = scmp.lt.s32.totalorder %s36, 1
        %s647 = scalar_select %p646, %s36, 1
        %s648 = smul.addr %s647, 2
        %s649 = smul.addr %s648, 8
        %s650 = scalar_lea.vmem %s1, %s649
        %p651 = pneg %p83
        %p652 = pneg %p80
        %p653 = scmp.lt.s32.totalorder %s36, 1
        %s654 = scalar_select %p653, %s36, 1
        %s655 = smul.addr %s654, 2
        %s656 = smul.addr %s655, 8
        %s657 = scalar_lea.vmem %s2, %s656
        %p658 = pneg %p109
        %p659 = pneg %p106
        %p660 = pneg %p130
        %p661 = pneg %p127
        %p662 = pneg %p151
        %p663 = pneg %p148
        %p664 = pneg %p172
        %p665 = pneg %p169
        %p666 = pneg %p193
        %p667 = pneg %p190
        %p668 = pneg %p214
        %p669 = pneg %p211
        %p670 = pneg %p235
        %p671 = pneg %p232
        %p672 = pneg %p256
        %p673 = pneg %p253
        %p674 = pneg %p277
        %p675 = pneg %p274
        %p676 = pneg %p298
        %p677 = pneg %p295
        %p678 = pneg %p319
        %p679 = pneg %p316
        %p680 = pneg %p340
        %p681 = pneg %p337
        %p682 = pneg %p361
        %p683 = pneg %p358
        %p684 = pneg %p382
        %p685 = pneg %p379
        %p686 = pneg %p403
        %p687 = pneg %p400
        %p688 = pneg %p424
        %p689 = pneg %p421
        %p690 = pneg %p445
        %p691 = pneg %p442
        %p692 = pneg %p471
        %p693 = pneg %p468
        %s694 = sand.u32 %s458, 1
        %s695 = scalar_lea.sflag [#allocation4], %s694
        %s696 = sand.u32 %s458, 1
        %s697 = smul.addr %s696, 16
        %s698 = scalar_lea.vmem [#allocation11], %s697
        %p699 = scmp.lt.s32.totalorder %s36, 1
        %s700 = scalar_select %p699, %s36, 1
        %s701 = smul.addr %s700, 2
        %s702 = smul.addr %s701, 8
        %s703 = scalar_lea.vmem %s0, %s702
        %p704 = scmp.lt.s32.totalorder %s36, 1
        %s705 = scalar_select %p704, %s36, 1
        %s706 = smul.addr %s705, 2
        %s707 = smul.addr %s706, 8
        %s708 = scalar_lea.vmem %s1, %s707
        %p709 = scmp.lt.s32.totalorder %s36, 1
        %s710 = scalar_select %p709, %s36, 1
        %s711 = smul.addr %s710, 2
        %s712 = smul.addr %s711, 8
        %s713 = scalar_lea.vmem %s2, %s712
        %v714 = vld [vmem:[%s703] sm:$0xff]
        %v715 = vld [vmem:[%s703 + $0x8] sm:$0xff]
        %v716 = vld [vmem:[%s708] sm:$0xff]
        %v717 = vld [vmem:[%s708 + $0x8] sm:$0xff]
        %v718 = vld [vmem:[%s713] sm:$0xff]
        %v719 = vld [vmem:[%s713 + $0x8] sm:$0xff]
        %v720 = vadd.f32 %v714, %v716
        %v721 = vadd.f32 %v715, %v717
        %v722 = vld [vmem:[#allocation2] sm:$0xff]
        %v723 = vld [vmem:[#allocation2 + $0x8] sm:$0xff]
        %v724 = vld [vmem:[#allocation2 + $0x10] sm:$0xff]
        %v725 = vld [vmem:[#allocation2 + $0x18] sm:$0xff]
        %v726 = vld [vmem:[%s6] sm:$0x1]
        %v728 = vlaneseq
        %v729 = vshrl.u32 %v728, 7
        %v730 = vsub.s32 0, %v729
        %v731 = vrot.slane %v726, %v730
        %vm733 = vcmask 261120
        %v735 = vsel %vm733, %v720, 0
        %v738 = vsel %vm733, %v721, 0
        %740 = vmatprep.subr.mxu0 0.0
        %741 = vmatpush1.msra.mxu0 %v722
        %742 = vmatprep.subr.mxu0 0.0
        %743 = vmatpush1.msra.mxu0 %v723
        %744 = vmatprep.subr.mxu0 0.0
        %745 = vmatpush1.msra.mxu0 %v724
        %746 = vmatprep.subr.mxu0 0.0
        %747 = vmatpush1.msra.mxu0 %v725
        %748 = vmatprep.subr.mxu0 0.0
        %749 = vmatpush1.msra.mxu0 0.0
        %750 = vmatprep.subr.mxu0 0.0
        %751 = vmatpush1.msra.mxu0 0.0
        %752 = vmatprep.subr.mxu0 0.0
        %753 = vmatpush1.msra.mxu0 0.0
        %754 = vmatprep.subr.mxu0 0.0
        %755 = vmatpush1.msra.mxu0 0.0
        %756 = vmatprep.subr.mxu0 0.0
        %757 = vmatpush1.msra.mxu0 0.0
        %758 = vmatprep.subr.mxu0 0.0
        %759 = vmatpush1.msra.mxu0 0.0
        %760 = vmatprep.subr.mxu0 0.0
        %761 = vmatpush1.msra.mxu0 0.0
        %762 = vmatprep.subr.mxu0 0.0
        %763 = vmatpush1.msra.mxu0 0.0
        %764 = vmatprep.subr.mxu0 0.0
        %765 = vmatpush1.msra.mxu0 0.0
        %766 = vmatprep.subr.mxu0 0.0
        %767 = vmatpush1.msra.mxu0 0.0
        %768 = vmatprep.subr.mxu0 0.0
        %769 = vmatpush1.msra.mxu0 0.0
        %770 = vmatprep.subr.mxu0 0.0
        %771 = vmatpush1.msra.mxu0 0.0
        %772 = vmatprep.subr.mxu0 0.0
        %773 = vmatpush1.msra.mxu0 0.0
        %774 = vmatprep.subr.mxu0 0.0
        %775 = vmatpush1.msra.mxu0 0.0
        %776 = vmatprep.subr.mxu0 0.0
        %777 = vmatpush1.msra.mxu0 0.0
        %778 = vmatprep.subr.mxu0 0.0
        %779 = vmatpush1.msra.mxu0 0.0
        %780 = vmatprep.subr.mxu0 0.0
        %781 = vmatpush1.msra.mxu0 0.0
        %782 = vmatprep.subr.mxu0 0.0
        %783 = vmatpush1.msra.mxu0 0.0
        %784 = vmatprep.subr.mxu0 0.0
        %785 = vmatpush1.msra.mxu0 0.0
        %786 = vmatprep.subr.mxu0 0.0
        %787 = vmatpush1.msra.mxu0 0.0
        %788 = vmatprep.subr.mxu0 0.0
        %789 = vmatpush1.msra.mxu0 0.0
        %790 = vmatprep.subr.mxu0 0.0
        %791 = vmatpush1.msra.mxu0 0.0
        %792 = vmatprep.subr.mxu0 0.0
        %793 = vmatpush1.msra.mxu0 0.0
        %794 = vmatprep.subr.mxu0 0.0
        %795 = vmatpush1.msra.mxu0 0.0
        %796 = vmatprep.subr.mxu0 0.0
        %797 = vmatpush1.msra.mxu0 0.0
        %798 = vmatprep.subr.mxu0 0.0
        %799 = vmatpush1.msra.mxu0 0.0
        %800 = vmatprep.subr.mxu0 0.0
        %801 = vmatpush1.msra.mxu0 0.0
        %802 = vmatprep.subr.mxu0 0.0
        %803 = vmatpush1.msra.mxu0 0.0
        %804 = vmatprep.mubr.f32.mxu0 0.0
        %805 = vmatmul.mubr.f32.gmra.mrb[0].mxu0 %v735
        %v806 = vpop.f32.mrb[0].mxu0
        %v807 = vadd.f32 %v731, %v806
        %v808 = vpop.f32.mrb[0].mxu0
        %809 = vmatprep.mubr.f32.mxu0 0.0
        %810 = vmatmul.mubr.f32.gmra.mrb[0].mxu0 %v738
        %v811 = vpop.f32.mrb[0].mxu0
        %v812 = vadd.f32 %v731, %v811
        %v813 = vpop.f32.mrb[0].mxu0
        %814 = vdwg.mxu0
        %v815 = vld [vmem:[#allocation5] sm:$0xff]
        %v816 = vld [vmem:[#allocation5 + $0x8] sm:$0xff]
        %v817 = vld [vmem:[#allocation5 + $0x10] sm:$0xff]
        %v818 = vld [vmem:[#allocation5 + $0x18] sm:$0xff]
        %v819 = vld [vmem:[%s7] sm:$0x1]
        %v821 = vlaneseq
        %v822 = vshrl.u32 %v821, 7
        %v823 = vsub.s32 0, %v822
        %v824 = vrot.slane %v819, %v823
        %826 = vmatprep.subr.mxu0 0.0
        %827 = vmatpush1.msra.mxu0 %v815
        %828 = vmatprep.subr.mxu0 0.0
        %829 = vmatpush1.msra.mxu0 %v816
        %830 = vmatprep.subr.mxu0 0.0
        %831 = vmatpush1.msra.mxu0 %v817
        %832 = vmatprep.subr.mxu0 0.0
        %833 = vmatpush1.msra.mxu0 %v818
        %834 = vmatprep.subr.mxu0 0.0
        %835 = vmatpush1.msra.mxu0 0.0
        %836 = vmatprep.subr.mxu0 0.0
        %837 = vmatpush1.msra.mxu0 0.0
        %838 = vmatprep.subr.mxu0 0.0
        %839 = vmatpush1.msra.mxu0 0.0
        %840 = vmatprep.subr.mxu0 0.0
        %841 = vmatpush1.msra.mxu0 0.0
        %842 = vmatprep.subr.mxu0 0.0
        %843 = vmatpush1.msra.mxu0 0.0
        %844 = vmatprep.subr.mxu0 0.0
        %845 = vmatpush1.msra.mxu0 0.0
        %846 = vmatprep.subr.mxu0 0.0
        %847 = vmatpush1.msra.mxu0 0.0
        %848 = vmatprep.subr.mxu0 0.0
        %849 = vmatpush1.msra.mxu0 0.0
        %850 = vmatprep.subr.mxu0 0.0
        %851 = vmatpush1.msra.mxu0 0.0
        %852 = vmatprep.subr.mxu0 0.0
        %853 = vmatpush1.msra.mxu0 0.0
        %854 = vmatprep.subr.mxu0 0.0
        %855 = vmatpush1.msra.mxu0 0.0
        %856 = vmatprep.subr.mxu0 0.0
        %857 = vmatpush1.msra.mxu0 0.0
        %858 = vmatprep.subr.mxu0 0.0
        %859 = vmatpush1.msra.mxu0 0.0
        %860 = vmatprep.subr.mxu0 0.0
        %861 = vmatpush1.msra.mxu0 0.0
        %862 = vmatprep.subr.mxu0 0.0
        %863 = vmatpush1.msra.mxu0 0.0
        %864 = vmatprep.subr.mxu0 0.0
        %865 = vmatpush1.msra.mxu0 0.0
        %866 = vmatprep.subr.mxu0 0.0
        %867 = vmatpush1.msra.mxu0 0.0
        %868 = vmatprep.subr.mxu0 0.0
        %869 = vmatpush1.msra.mxu0 0.0
        %870 = vmatprep.subr.mxu0 0.0
        %871 = vmatpush1.msra.mxu0 0.0
        %872 = vmatprep.subr.mxu0 0.0
        %873 = vmatpush1.msra.mxu0 0.0
        %874 = vmatprep.subr.mxu0 0.0
        %875 = vmatpush1.msra.mxu0 0.0
        %876 = vmatprep.subr.mxu0 0.0
        %877 = vmatpush1.msra.mxu0 0.0
        %878 = vmatprep.subr.mxu0 0.0
        %879 = vmatpush1.msra.mxu0 0.0
        %880 = vmatprep.subr.mxu0 0.0
        %881 = vmatpush1.msra.mxu0 0.0
        %882 = vmatprep.subr.mxu0 0.0
        %883 = vmatpush1.msra.mxu0 0.0
        %884 = vmatprep.subr.mxu0 0.0
        %885 = vmatpush1.msra.mxu0 0.0
        %886 = vmatprep.subr.mxu0 0.0
        %887 = vmatpush1.msra.mxu0 0.0
        %888 = vmatprep.subr.mxu0 0.0
        %889 = vmatpush1.msra.mxu0 0.0
        %890 = vmatprep.mubr.f32.mxu0 0.0
        %891 = vmatmul.mubr.f32.gmra.mrb[0].mxu0 %v735
        %v892 = vpop.f32.mrb[0].mxu0
        %v893 = vadd.f32 %v824, %v892
        %v894 = vpop.f32.mrb[0].mxu0
        %895 = vmatprep.mubr.f32.mxu0 0.0
        %896 = vmatmul.mubr.f32.gmra.mrb[0].mxu0 %v738
        %v897 = vpop.f32.mrb[0].mxu0
        %v898 = vadd.f32 %v824, %v897
        %v899 = vpop.f32.mrb[0].mxu0
        %900 = vdwg.mxu0
        %v901 = vld [vmem:[#allocation7] sm:$0xff]
        %v902 = vld [vmem:[#allocation7 + $0x8] sm:$0xff]
        %v903 = vld [vmem:[#allocation7 + $0x10] sm:$0xff]
        %v904 = vld [vmem:[#allocation7 + $0x18] sm:$0xff]
        %v905 = vld [vmem:[%s8] sm:$0x1]
        %v907 = vlaneseq
        %v908 = vshrl.u32 %v907, 7
        %v909 = vsub.s32 0, %v908
        %v910 = vrot.slane %v905, %v909
        %v913 = vsel %vm733, %v714, 0
        %v916 = vsel %vm733, %v715, 0
        %918 = vmatprep.subr.mxu0 0.0
        %919 = vmatpush1.msra.mxu0 %v901
        %920 = vmatprep.subr.mxu0 0.0
        %921 = vmatpush1.msra.mxu0 %v902
        %922 = vmatprep.subr.mxu0 0.0
        %923 = vmatpush1.msra.mxu0 %v903
        %924 = vmatprep.subr.mxu0 0.0
        %925 = vmatpush1.msra.mxu0 %v904
        %926 = vmatprep.subr.mxu0 0.0
        %927 = vmatpush1.msra.mxu0 0.0
        %928 = vmatprep.subr.mxu0 0.0
        %929 = vmatpush1.msra.mxu0 0.0
        %930 = vmatprep.subr.mxu0 0.0
        %931 = vmatpush1.msra.mxu0 0.0
        %932 = vmatprep.subr.mxu0 0.0
        %933 = vmatpush1.msra.mxu0 0.0
        %934 = vmatprep.subr.mxu0 0.0
        %935 = vmatpush1.msra.mxu0 0.0
        %936 = vmatprep.subr.mxu0 0.0
        %937 = vmatpush1.msra.mxu0 0.0
        %938 = vmatprep.subr.mxu0 0.0
        %939 = vmatpush1.msra.mxu0 0.0
        %940 = vmatprep.subr.mxu0 0.0
        %941 = vmatpush1.msra.mxu0 0.0
        %942 = vmatprep.subr.mxu0 0.0
        %943 = vmatpush1.msra.mxu0 0.0
        %944 = vmatprep.subr.mxu0 0.0
        %945 = vmatpush1.msra.mxu0 0.0
        %946 = vmatprep.subr.mxu0 0.0
        %947 = vmatpush1.msra.mxu0 0.0
        %948 = vmatprep.subr.mxu0 0.0
        %949 = vmatpush1.msra.mxu0 0.0
        %950 = vmatprep.subr.mxu0 0.0
        %951 = vmatpush1.msra.mxu0 0.0
        %952 = vmatprep.subr.mxu0 0.0
        %953 = vmatpush1.msra.mxu0 0.0
        %954 = vmatprep.subr.mxu0 0.0
        %955 = vmatpush1.msra.mxu0 0.0
        %956 = vmatprep.subr.mxu0 0.0
        %957 = vmatpush1.msra.mxu0 0.0
        %958 = vmatprep.subr.mxu0 0.0
        %959 = vmatpush1.msra.mxu0 0.0
        %960 = vmatprep.subr.mxu0 0.0
        %961 = vmatpush1.msra.mxu0 0.0
        %962 = vmatprep.subr.mxu0 0.0
        %963 = vmatpush1.msra.mxu0 0.0
        %964 = vmatprep.subr.mxu0 0.0
        %965 = vmatpush1.msra.mxu0 0.0
        %966 = vmatprep.subr.mxu0 0.0
        %967 = vmatpush1.msra.mxu0 0.0
        %968 = vmatprep.subr.mxu0 0.0
        %969 = vmatpush1.msra.mxu0 0.0
        %970 = vmatprep.subr.mxu0 0.0
        %971 = vmatpush1.msra.mxu0 0.0
        %972 = vmatprep.subr.mxu0 0.0
        %973 = vmatpush1.msra.mxu0 0.0
        %974 = vmatprep.subr.mxu0 0.0
        %975 = vmatpush1.msra.mxu0 0.0
        %976 = vmatprep.subr.mxu0 0.0
        %977 = vmatpush1.msra.mxu0 0.0
        %978 = vmatprep.subr.mxu0 0.0
        %979 = vmatpush1.msra.mxu0 0.0
        %980 = vmatprep.subr.mxu0 0.0
        %981 = vmatpush1.msra.mxu0 0.0
        %982 = vmatprep.mubr.f32.mxu0 0.0
        %983 = vmatmul.mubr.f32.gmra.mrb[0].mxu0 %v913
        %v984 = vpop.f32.mrb[0].mxu0
        %v985 = vadd.f32 %v910, %v984
        %v986 = vpop.f32.mrb[0].mxu0
        %987 = vmatprep.mubr.f32.mxu0 0.0
        %988 = vmatmul.mubr.f32.gmra.mrb[0].mxu0 %v916
        %v989 = vpop.f32.mrb[0].mxu0
        %v990 = vadd.f32 %v910, %v989
        %v991 = vpop.f32.mrb[0].mxu0
        %992 = vdwg.mxu0
        %vm993 = vcmask 64512
        %v995 = vsel %vm993, %v807, 0
        %v998 = vsel %vm993, %v812, 0
        %v1001 = vsel %vm993, %v893, 0
        %v1004 = vsel %vm993, %v898, 0
        %1006 = vmatprep.subr.mxu0 0.0
        %1007 = vmatpush1.xpose.msra.mxu0 %v1001
        %1008 = vmatprep.subr.mxu0 0.0
        %1009 = vmatpush1.xpose.msra.mxu0 %v1004
        %1010 = vmatprep.subr.mxu0 0.0
        %1011 = vmatpush1.xpose.msra.mxu0 0.0
        %1012 = vmatprep.subr.mxu0 0.0
        %1013 = vmatpush1.xpose.msra.mxu0 0.0
        %1014 = vmatprep.subr.mxu0 0.0
        %1015 = vmatpush1.xpose.msra.mxu0 0.0
        %1016 = vmatprep.subr.mxu0 0.0
        %1017 = vmatpush1.xpose.msra.mxu0 0.0
        %1018 = vmatprep.subr.mxu0 0.0
        %1019 = vmatpush1.xpose.msra.mxu0 0.0
        %1020 = vmatprep.subr.mxu0 0.0
        %1021 = vmatpush1.xpose.msra.mxu0 0.0
        %1022 = vmatprep.subr.mxu0 0.0
        %1023 = vmatpush1.xpose.msra.mxu0 0.0
        %1024 = vmatprep.subr.mxu0 0.0
        %1025 = vmatpush1.xpose.msra.mxu0 0.0
        %1026 = vmatprep.subr.mxu0 0.0
        %1027 = vmatpush1.xpose.msra.mxu0 0.0
        %1028 = vmatprep.subr.mxu0 0.0
        %1029 = vmatpush1.xpose.msra.mxu0 0.0
        %1030 = vmatprep.subr.mxu0 0.0
        %1031 = vmatpush1.xpose.msra.mxu0 0.0
        %1032 = vmatprep.subr.mxu0 0.0
        %1033 = vmatpush1.xpose.msra.mxu0 0.0
        %1034 = vmatprep.subr.mxu0 0.0
        %1035 = vmatpush1.xpose.msra.mxu0 0.0
        %1036 = vmatprep.subr.mxu0 0.0
        %1037 = vmatpush1.xpose.msra.mxu0 0.0
        %1038 = vmatprep.subr.mxu0 0.0
        %1039 = vmatpush1.xpose.msra.mxu0 0.0
        %1040 = vmatprep.subr.mxu0 0.0
        %1041 = vmatpush1.xpose.msra.mxu0 0.0
        %1042 = vmatprep.subr.mxu0 0.0
        %1043 = vmatpush1.xpose.msra.mxu0 0.0
        %1044 = vmatprep.subr.mxu0 0.0
        %1045 = vmatpush1.xpose.msra.mxu0 0.0
        %1046 = vmatprep.subr.mxu0 0.0
        %1047 = vmatpush1.xpose.msra.mxu0 0.0
        %1048 = vmatprep.subr.mxu0 0.0
        %1049 = vmatpush1.xpose.msra.mxu0 0.0
        %1050 = vmatprep.subr.mxu0 0.0
        %1051 = vmatpush1.xpose.msra.mxu0 0.0
        %1052 = vmatprep.subr.mxu0 0.0
        %1053 = vmatpush1.xpose.msra.mxu0 0.0
        %1054 = vmatprep.subr.mxu0 0.0
        %1055 = vmatpush1.xpose.msra.mxu0 0.0
        %1056 = vmatprep.subr.mxu0 0.0
        %1057 = vmatpush1.xpose.msra.mxu0 0.0
        %1058 = vmatprep.subr.mxu0 0.0
        %1059 = vmatpush1.xpose.msra.mxu0 0.0
        %1060 = vmatprep.subr.mxu0 0.0
        %1061 = vmatpush1.xpose.msra.mxu0 0.0
        %1062 = vmatprep.subr.mxu0 0.0
        %1063 = vmatpush1.xpose.msra.mxu0 0.0
        %1064 = vmatprep.subr.mxu0 0.0
        %1065 = vmatpush1.xpose.msra.mxu0 0.0
        %1066 = vmatprep.subr.mxu0 0.0
        %1067 = vmatpush1.xpose.msra.mxu0 0.0
        %1068 = vmatprep.subr.mxu0 0.0
        %1069 = vmatpush1.xpose.msra.mxu0 0.0
        %1070 = vmatprep.mubr.f32.mxu0 0.0
        %1071 = vmatmul.mubr.f32.gmra.mrb[0].mxu0 %v995
        %v1072 = vpop.f32.mrb[0].mxu0
        %v1073 = vadd.f32 0.0, %v1072
        %v1074 = vpop.f32.mrb[0].mxu0
        %1075 = vmatprep.mubr.f32.mxu0 0.0
        %1076 = vmatmul.mubr.f32.gmra.mrb[0].mxu0 %v998
        %v1077 = vpop.f32.mrb[0].mxu0
        %v1078 = vadd.f32 0.0, %v1077
        %v1079 = vpop.f32.mrb[0].mxu0
        %1080 = vdwg.mxu0
        %v1081 = vmul.f32 %v1073, 0.35355338
        %v1082 = vmul.f32 %v1078, 0.35355338
        %v1083 = vadd.f32 %v1081, %v718
        %v1084 = vadd.f32 %v1082, %v719
        %vm1085 = vcmask 130048
        %v1086 = vsel %vm1085, %v1083, -inf
        %1087 = vmax.xlane.f32.xlu0 %v1086
        %v1088 = vpop.xlane.xlu0 %1087
        %v1089 = vsel %vm1085, %v1084, -inf
        %1090 = vmax.xlane.f32.xlu0 %v1089
        %v1091 = vpop.xlane.xlu0 %1090
        %v1092 = vsub.f32 %v1083, %v1088
        %v1093 = vsub.f32 %v1084, %v1091
        %v1094 = vmul.f32 %v1092, 1.442695
        %v1095 = vpow.pop %v1094
        %v1096 = vmul.f32 %v1093, 1.442695
        %v1097 = vpow.pop %v1096
        %v1098 = vsel %vm1085, %v1095, 0.0
        %1099 = vadd.xlane.f32.xlu0 %v1098
        %v1100 = vpop.xlane.xlu0 %1099
        %v1101 = vsel %vm1085, %v1097, 0.0
        %1102 = vadd.xlane.f32.xlu0 %v1101
        %v1103 = vpop.xlane.xlu0 %1102
        %v1104 = vrcp.pop %v1100
        %v1105 = vmul.f32 %v1095, %v1104
        %v1106 = vrcp.pop %v1103
        %v1107 = vmul.f32 %v1097, %v1106
        %v1109 = vsel %vm1085, %v1105, 0
        %v1112 = vsel %vm1085, %v1107, 0
        %1114 = vmatprep.subr.mxu0 0.0
        %1115 = vmatpush1.msra.mxu0 %v985
        %1116 = vmatprep.subr.mxu0 0.0
        %1117 = vmatpush1.msra.mxu0 %v990
        %1118 = vmatprep.subr.mxu0 0.0
        %1119 = vmatpush1.msra.mxu0 0.0
        %1120 = vmatprep.subr.mxu0 0.0
        %1121 = vmatpush1.msra.mxu0 0.0
        %1122 = vmatprep.subr.mxu0 0.0
        %1123 = vmatpush1.msra.mxu0 0.0
        %1124 = vmatprep.subr.mxu0 0.0
        %1125 = vmatpush1.msra.mxu0 0.0
        %1126 = vmatprep.subr.mxu0 0.0
        %1127 = vmatpush1.msra.mxu0 0.0
        %1128 = vmatprep.subr.mxu0 0.0
        %1129 = vmatpush1.msra.mxu0 0.0
        %1130 = vmatprep.subr.mxu0 0.0
        %1131 = vmatpush1.msra.mxu0 0.0
        %1132 = vmatprep.subr.mxu0 0.0
        %1133 = vmatpush1.msra.mxu0 0.0
        %1134 = vmatprep.subr.mxu0 0.0
        %1135 = vmatpush1.msra.mxu0 0.0
        %1136 = vmatprep.subr.mxu0 0.0
        %1137 = vmatpush1.msra.mxu0 0.0
        %1138 = vmatprep.subr.mxu0 0.0
        %1139 = vmatpush1.msra.mxu0 0.0
        %1140 = vmatprep.subr.mxu0 0.0
        %1141 = vmatpush1.msra.mxu0 0.0
        %1142 = vmatprep.subr.mxu0 0.0
        %1143 = vmatpush1.msra.mxu0 0.0
        %1144 = vmatprep.subr.mxu0 0.0
        %1145 = vmatpush1.msra.mxu0 0.0
        %1146 = vmatprep.subr.mxu0 0.0
        %1147 = vmatpush1.msra.mxu0 0.0
        %1148 = vmatprep.subr.mxu0 0.0
        %1149 = vmatpush1.msra.mxu0 0.0
        %1150 = vmatprep.subr.mxu0 0.0
        %1151 = vmatpush1.msra.mxu0 0.0
        %1152 = vmatprep.subr.mxu0 0.0
        %1153 = vmatpush1.msra.mxu0 0.0
        %1154 = vmatprep.subr.mxu0 0.0
        %1155 = vmatpush1.msra.mxu0 0.0
        %1156 = vmatprep.subr.mxu0 0.0
        %1157 = vmatpush1.msra.mxu0 0.0
        %1158 = vmatprep.subr.mxu0 0.0
        %1159 = vmatpush1.msra.mxu0 0.0
        %1160 = vmatprep.subr.mxu0 0.0
        %1161 = vmatpush1.msra.mxu0 0.0
        %1162 = vmatprep.subr.mxu0 0.0
        %1163 = vmatpush1.msra.mxu0 0.0
        %1164 = vmatprep.subr.mxu0 0.0
        %1165 = vmatpush1.msra.mxu0 0.0
        %1166 = vmatprep.subr.mxu0 0.0
        %1167 = vmatpush1.msra.mxu0 0.0
        %1168 = vmatprep.subr.mxu0 0.0
        %1169 = vmatpush1.msra.mxu0 0.0
        %1170 = vmatprep.subr.mxu0 0.0
        %1171 = vmatpush1.msra.mxu0 0.0
        %1172 = vmatprep.subr.mxu0 0.0
        %1173 = vmatpush1.msra.mxu0 0.0
        %1174 = vmatprep.subr.mxu0 0.0
        %1175 = vmatpush1.msra.mxu0 0.0
        %1176 = vmatprep.subr.mxu0 0.0
        %1177 = vmatpush1.msra.mxu0 0.0
        %1178 = vmatprep.mubr.f32.mxu0 0.0
        %1179 = vmatmul.mubr.f32.gmra.mrb[0].mxu0 %v1109
        %v1180 = vpop.f32.mrb[0].mxu0
        %v1181 = vadd.f32 0.0, %v1180
        %v1182 = vpop.f32.mrb[0].mxu0
        %1183 = vmatprep.mubr.f32.mxu0 0.0
        %1184 = vmatmul.mubr.f32.gmra.mrb[0].mxu0 %v1112
        %v1185 = vpop.f32.mrb[0].mxu0
        %v1186 = vadd.f32 0.0, %v1185
        %v1187 = vpop.f32.mrb[0].mxu0
        %1188 = vdwg.mxu0
        %1189 = vrot.lane.b32.xlu0 %v807, 120
        %v1190 = vpop.permute.xlu0 %1189
        %1191 = vrot.lane.b32.xlu0 %v812, 120
        %v1192 = vpop.permute.xlu0 %1191
        %1193 = vrot.lane.b32.xlu0 %v893, 120
        %v1194 = vpop.permute.xlu0 %1193
        %1195 = vrot.lane.b32.xlu0 %v898, 120
        %v1196 = vpop.permute.xlu0 %1195
        %v1197 = vsel %vm993, %v1190, 0
        %v1199 = vsel %vm993, %v1192, 0
        %v1201 = vsel %vm993, %v1194, 0
        %v1203 = vsel %vm993, %v1196, 0
        %1205 = vmatprep.subr.mxu0 0.0
        %1206 = vmatpush1.xpose.msra.mxu0 %v1201
        %1207 = vmatprep.subr.mxu0 0.0
        %1208 = vmatpush1.xpose.msra.mxu0 %v1203
        %1209 = vmatprep.subr.mxu0 0.0
        %1210 = vmatpush1.xpose.msra.mxu0 0.0
        %1211 = vmatprep.subr.mxu0 0.0
        %1212 = vmatpush1.xpose.msra.mxu0 0.0
        %1213 = vmatprep.subr.mxu0 0.0
        %1214 = vmatpush1.xpose.msra.mxu0 0.0
        %1215 = vmatprep.subr.mxu0 0.0
        %1216 = vmatpush1.xpose.msra.mxu0 0.0
        %1217 = vmatprep.subr.mxu0 0.0
        %1218 = vmatpush1.xpose.msra.mxu0 0.0
        %1219 = vmatprep.subr.mxu0 0.0
        %1220 = vmatpush1.xpose.msra.mxu0 0.0
        %1221 = vmatprep.subr.mxu0 0.0
        %1222 = vmatpush1.xpose.msra.mxu0 0.0
        %1223 = vmatprep.subr.mxu0 0.0
        %1224 = vmatpush1.xpose.msra.mxu0 0.0
        %1225 = vmatprep.subr.mxu0 0.0
        %1226 = vmatpush1.xpose.msra.mxu0 0.0
        %1227 = vmatprep.subr.mxu0 0.0
        %1228 = vmatpush1.xpose.msra.mxu0 0.0
        %1229 = vmatprep.subr.mxu0 0.0
        %1230 = vmatpush1.xpose.msra.mxu0 0.0
        %1231 = vmatprep.subr.mxu0 0.0
        %1232 = vmatpush1.xpose.msra.mxu0 0.0
        %1233 = vmatprep.subr.mxu0 0.0
        %1234 = vmatpush1.xpose.msra.mxu0 0.0
        %1235 = vmatprep.subr.mxu0 0.0
        %1236 = vmatpush1.xpose.msra.mxu0 0.0
        %1237 = vmatprep.subr.mxu0 0.0
        %1238 = vmatpush1.xpose.msra.mxu0 0.0
        %1239 = vmatprep.subr.mxu0 0.0
        %1240 = vmatpush1.xpose.msra.mxu0 0.0
        %1241 = vmatprep.subr.mxu0 0.0
        %1242 = vmatpush1.xpose.msra.mxu0 0.0
        %1243 = vmatprep.subr.mxu0 0.0
        %1244 = vmatpush1.xpose.msra.mxu0 0.0
        %1245 = vmatprep.subr.mxu0 0.0
        %1246 = vmatpush1.xpose.msra.mxu0 0.0
        %1247 = vmatprep.subr.mxu0 0.0
        %1248 = vmatpush1.xpose.msra.mxu0 0.0
        %1249 = vmatprep.subr.mxu0 0.0
        %1250 = vmatpush1.xpose.msra.mxu0 0.0
        %1251 = vmatprep.subr.mxu0 0.0
        %1252 = vmatpush1.xpose.msra.mxu0 0.0
        %1253 = vmatprep.subr.mxu0 0.0
        %1254 = vmatpush1.xpose.msra.mxu0 0.0
        %1255 = vmatprep.subr.mxu0 0.0
        %1256 = vmatpush1.xpose.msra.mxu0 0.0
        %1257 = vmatprep.subr.mxu0 0.0
        %1258 = vmatpush1.xpose.msra.mxu0 0.0
        %1259 = vmatprep.subr.mxu0 0.0
        %1260 = vmatpush1.xpose.msra.mxu0 0.0
        %1261 = vmatprep.subr.mxu0 0.0
        %1262 = vmatpush1.xpose.msra.mxu0 0.0
        %1263 = vmatprep.subr.mxu0 0.0
        %1264 = vmatpush1.xpose.msra.mxu0 0.0
        %1265 = vmatprep.subr.mxu0 0.0
        %1266 = vmatpush1.xpose.msra.mxu0 0.0
        %1267 = vmatprep.subr.mxu0 0.0
        %1268 = vmatpush1.xpose.msra.mxu0 0.0
        %1269 = vmatprep.mubr.f32.mxu0 0.0
        %1270 = vmatmul.mubr.f32.gmra.mrb[0].mxu0 %v1197
        %v1271 = vpop.f32.mrb[0].mxu0
        %v1272 = vadd.f32 0.0, %v1271
        %v1273 = vpop.f32.mrb[0].mxu0
        %1274 = vmatprep.mubr.f32.mxu0 0.0
        %1275 = vmatmul.mubr.f32.gmra.mrb[0].mxu0 %v1199
        %v1276 = vpop.f32.mrb[0].mxu0
        %v1277 = vadd.f32 0.0, %v1276
        %v1278 = vpop.f32.mrb[0].mxu0
        %1279 = vdwg.mxu0
        %v1280 = vmul.f32 %v1272, 0.35355338
        %v1281 = vmul.f32 %v1277, 0.35355338
        %v1282 = vadd.f32 %v1280, %v718
        %v1283 = vadd.f32 %v1281, %v719
        %v1284 = vsel %vm1085, %v1282, -inf
        %1285 = vmax.xlane.f32.xlu0 %v1284
        %v1286 = vpop.xlane.xlu0 %1285
        %v1287 = vsel %vm1085, %v1283, -inf
        %1288 = vmax.xlane.f32.xlu0 %v1287
        %v1289 = vpop.xlane.xlu0 %1288
        %v1290 = vsub.f32 %v1282, %v1286
        %v1291 = vsub.f32 %v1283, %v1289
        %v1292 = vmul.f32 %v1290, 1.442695
        %v1293 = vpow.pop %v1292
        %v1294 = vmul.f32 %v1291, 1.442695
        %v1295 = vpow.pop %v1294
        %v1296 = vsel %vm1085, %v1293, 0.0
        %1297 = vadd.xlane.f32.xlu0 %v1296
        %v1298 = vpop.xlane.xlu0 %1297
        %v1299 = vsel %vm1085, %v1295, 0.0
        %1300 = vadd.xlane.f32.xlu0 %v1299
        %v1301 = vpop.xlane.xlu0 %1300
        %v1302 = vrcp.pop %v1298
        %v1303 = vmul.f32 %v1293, %v1302
        %v1304 = vrcp.pop %v1301
        %v1305 = vmul.f32 %v1295, %v1304
        %1308 = vrot.lane.b32.xlu0 %v985, 120
        %v1309 = vpop.permute.xlu0 %1308
        %1310 = vrot.lane.b32.xlu0 %v990, 120
        %v1311 = vpop.permute.xlu0 %1310
        %v1315 = vsel %vm1085, %v1303, 0
        %v1318 = vsel %vm1085, %v1305, 0
        %1320 = vmatprep.subr.mxu0 0.0
        %1321 = vmatpush1.msra.mxu0 %v1309
        %1322 = vmatprep.subr.mxu0 0.0
        %1323 = vmatpush1.msra.mxu0 %v1311
        %1324 = vmatprep.subr.mxu0 0.0
        %1325 = vmatpush1.msra.mxu0 0.0
        %1326 = vmatprep.subr.mxu0 0.0
        %1327 = vmatpush1.msra.mxu0 0.0
        %1328 = vmatprep.subr.mxu0 0.0
        %1329 = vmatpush1.msra.mxu0 0.0
        %1330 = vmatprep.subr.mxu0 0.0
        %1331 = vmatpush1.msra.mxu0 0.0
        %1332 = vmatprep.subr.mxu0 0.0
        %1333 = vmatpush1.msra.mxu0 0.0
        %1334 = vmatprep.subr.mxu0 0.0
        %1335 = vmatpush1.msra.mxu0 0.0
        %1336 = vmatprep.subr.mxu0 0.0
        %1337 = vmatpush1.msra.mxu0 0.0
        %1338 = vmatprep.subr.mxu0 0.0
        %1339 = vmatpush1.msra.mxu0 0.0
        %1340 = vmatprep.subr.mxu0 0.0
        %1341 = vmatpush1.msra.mxu0 0.0
        %1342 = vmatprep.subr.mxu0 0.0
        %1343 = vmatpush1.msra.mxu0 0.0
        %1344 = vmatprep.subr.mxu0 0.0
        %1345 = vmatpush1.msra.mxu0 0.0
        %1346 = vmatprep.subr.mxu0 0.0
        %1347 = vmatpush1.msra.mxu0 0.0
        %1348 = vmatprep.subr.mxu0 0.0
        %1349 = vmatpush1.msra.mxu0 0.0
        %1350 = vmatprep.subr.mxu0 0.0
        %1351 = vmatpush1.msra.mxu0 0.0
        %1352 = vmatprep.subr.mxu0 0.0
        %1353 = vmatpush1.msra.mxu0 0.0
        %1354 = vmatprep.subr.mxu0 0.0
        %1355 = vmatpush1.msra.mxu0 0.0
        %1356 = vmatprep.subr.mxu0 0.0
        %1357 = vmatpush1.msra.mxu0 0.0
        %1358 = vmatprep.subr.mxu0 0.0
        %1359 = vmatpush1.msra.mxu0 0.0
        %1360 = vmatprep.subr.mxu0 0.0
        %1361 = vmatpush1.msra.mxu0 0.0
        %1362 = vmatprep.subr.mxu0 0.0
        %1363 = vmatpush1.msra.mxu0 0.0
        %1364 = vmatprep.subr.mxu0 0.0
        %1365 = vmatpush1.msra.mxu0 0.0
        %1366 = vmatprep.subr.mxu0 0.0
        %1367 = vmatpush1.msra.mxu0 0.0
        %1368 = vmatprep.subr.mxu0 0.0
        %1369 = vmatpush1.msra.mxu0 0.0
        %1370 = vmatprep.subr.mxu0 0.0
        %1371 = vmatpush1.msra.mxu0 0.0
        %1372 = vmatprep.subr.mxu0 0.0
        %1373 = vmatpush1.msra.mxu0 0.0
        %1374 = vmatprep.subr.mxu0 0.0
        %1375 = vmatpush1.msra.mxu0 0.0
        %1376 = vmatprep.subr.mxu0 0.0
        %1377 = vmatpush1.msra.mxu0 0.0
        %1378 = vmatprep.subr.mxu0 0.0
        %1379 = vmatpush1.msra.mxu0 0.0
        %1380 = vmatprep.subr.mxu0 0.0
        %1381 = vmatpush1.msra.mxu0 0.0
        %1382 = vmatprep.subr.mxu0 0.0
        %1383 = vmatpush1.msra.mxu0 0.0
        %1384 = vmatprep.mubr.f32.mxu0 0.0
        %1385 = vmatmul.mubr.f32.gmra.mrb[0].mxu0 %v1315
        %v1386 = vpop.f32.mrb[0].mxu0
        %v1387 = vadd.f32 0.0, %v1386
        %v1388 = vpop.f32.mrb[0].mxu0
        %1389 = vmatprep.mubr.f32.mxu0 0.0
        %1390 = vmatmul.mubr.f32.gmra.mrb[0].mxu0 %v1318
        %v1391 = vpop.f32.mrb[0].mxu0
        %v1392 = vadd.f32 0.0, %v1391
        %v1393 = vpop.f32.mrb[0].mxu0
        %1394 = vdwg.mxu0
        %1395 = vrot.lane.b32.xlu0 %v807, 112
        %v1396 = vpop.permute.xlu0 %1395
        %1397 = vrot.lane.b32.xlu0 %v812, 112
        %v1398 = vpop.permute.xlu0 %1397
        %1399 = vrot.lane.b32.xlu0 %v893, 112
        %v1400 = vpop.permute.xlu0 %1399
        %1401 = vrot.lane.b32.xlu0 %v898, 112
        %v1402 = vpop.permute.xlu0 %1401
        %v1403 = vsel %vm993, %v1396, 0
        %v1405 = vsel %vm993, %v1398, 0
        %v1407 = vsel %vm993, %v1400, 0
        %v1409 = vsel %vm993, %v1402, 0
        %1411 = vmatprep.subr.mxu0 0.0
        %1412 = vmatpush1.xpose.msra.mxu0 %v1407
        %1413 = vmatprep.subr.mxu0 0.0
        %1414 = vmatpush1.xpose.msra.mxu0 %v1409
        %1415 = vmatprep.subr.mxu0 0.0
        %1416 = vmatpush1.xpose.msra.mxu0 0.0
        %1417 = vmatprep.subr.mxu0 0.0
        %1418 = vmatpush1.xpose.msra.mxu0 0.0
        %1419 = vmatprep.subr.mxu0 0.0
        %1420 = vmatpush1.xpose.msra.mxu0 0.0
        %1421 = vmatprep.subr.mxu0 0.0
        %1422 = vmatpush1.xpose.msra.mxu0 0.0
        %1423 = vmatprep.subr.mxu0 0.0
        %1424 = vmatpush1.xpose.msra.mxu0 0.0
        %1425 = vmatprep.subr.mxu0 0.0
        %1426 = vmatpush1.xpose.msra.mxu0 0.0
        %1427 = vmatprep.subr.mxu0 0.0
        %1428 = vmatpush1.xpose.msra.mxu0 0.0
        %1429 = vmatprep.subr.mxu0 0.0
        %1430 = vmatpush1.xpose.msra.mxu0 0.0
        %1431 = vmatprep.subr.mxu0 0.0
        %1432 = vmatpush1.xpose.msra.mxu0 0.0
        %1433 = vmatprep.subr.mxu0 0.0
        %1434 = vmatpush1.xpose.msra.mxu0 0.0
        %1435 = vmatprep.subr.mxu0 0.0
        %1436 = vmatpush1.xpose.msra.mxu0 0.0
        %1437 = vmatprep.subr.mxu0 0.0
        %1438 = vmatpush1.xpose.msra.mxu0 0.0
        %1439 = vmatprep.subr.mxu0 0.0
        %1440 = vmatpush1.xpose.msra.mxu0 0.0
        %1441 = vmatprep.subr.mxu0 0.0
        %1442 = vmatpush1.xpose.msra.mxu0 0.0
        %1443 = vmatprep.subr.mxu0 0.0
        %1444 = vmatpush1.xpose.msra.mxu0 0.0
        %1445 = vmatprep.subr.mxu0 0.0
        %1446 = vmatpush1.xpose.msra.mxu0 0.0
        %1447 = vmatprep.subr.mxu0 0.0
        %1448 = vmatpush1.xpose.msra.mxu0 0.0
        %1449 = vmatprep.subr.mxu0 0.0
        %1450 = vmatpush1.xpose.msra.mxu0 0.0
        %1451 = vmatprep.subr.mxu0 0.0
        %1452 = vmatpush1.xpose.msra.mxu0 0.0
        %1453 = vmatprep.subr.mxu0 0.0
        %1454 = vmatpush1.xpose.msra.mxu0 0.0
        %1455 = vmatprep.subr.mxu0 0.0
        %1456 = vmatpush1.xpose.msra.mxu0 0.0
        %1457 = vmatprep.subr.mxu0 0.0
        %1458 = vmatpush1.xpose.msra.mxu0 0.0
        %1459 = vmatprep.subr.mxu0 0.0
        %1460 = vmatpush1.xpose.msra.mxu0 0.0
        %1461 = vmatprep.subr.mxu0 0.0
        %1462 = vmatpush1.xpose.msra.mxu0 0.0
        %1463 = vmatprep.subr.mxu0 0.0
        %1464 = vmatpush1.xpose.msra.mxu0 0.0
        %1465 = vmatprep.subr.mxu0 0.0
        %1466 = vmatpush1.xpose.msra.mxu0 0.0
        %1467 = vmatprep.subr.mxu0 0.0
        %1468 = vmatpush1.xpose.msra.mxu0 0.0
        %1469 = vmatprep.subr.mxu0 0.0
        %1470 = vmatpush1.xpose.msra.mxu0 0.0
        %1471 = vmatprep.subr.mxu0 0.0
        %1472 = vmatpush1.xpose.msra.mxu0 0.0
        %1473 = vmatprep.subr.mxu0 0.0
        %1474 = vmatpush1.xpose.msra.mxu0 0.0
        %1475 = vmatprep.mubr.f32.mxu0 0.0
        %1476 = vmatmul.mubr.f32.gmra.mrb[0].mxu0 %v1403
        %v1477 = vpop.f32.mrb[0].mxu0
        %v1478 = vadd.f32 0.0, %v1477
        %v1479 = vpop.f32.mrb[0].mxu0
        %1480 = vmatprep.mubr.f32.mxu0 0.0
        %1481 = vmatmul.mubr.f32.gmra.mrb[0].mxu0 %v1405
        %v1482 = vpop.f32.mrb[0].mxu0
        %v1483 = vadd.f32 0.0, %v1482
        %v1484 = vpop.f32.mrb[0].mxu0
        %1485 = vdwg.mxu0
        %v1486 = vmul.f32 %v1478, 0.35355338
        %v1487 = vmul.f32 %v1483, 0.35355338
        %v1488 = vadd.f32 %v1486, %v718
        %v1489 = vadd.f32 %v1487, %v719
        %v1490 = vsel %vm1085, %v1488, -inf
        %1491 = vmax.xlane.f32.xlu0 %v1490
        %v1492 = vpop.xlane.xlu0 %1491
        %v1493 = vsel %vm1085, %v1489, -inf
        %1494 = vmax.xlane.f32.xlu0 %v1493
        %v1495 = vpop.xlane.xlu0 %1494
        %v1496 = vsub.f32 %v1488, %v1492
        %v1497 = vsub.f32 %v1489, %v1495
        %v1498 = vmul.f32 %v1496, 1.442695
        %v1499 = vpow.pop %v1498
        %v1500 = vmul.f32 %v1497, 1.442695
        %v1501 = vpow.pop %v1500
        %v1502 = vsel %vm1085, %v1499, 0.0
        %1503 = vadd.xlane.f32.xlu0 %v1502
        %v1504 = vpop.xlane.xlu0 %1503
        %v1505 = vsel %vm1085, %v1501, 0.0
        %1506 = vadd.xlane.f32.xlu0 %v1505
        %v1507 = vpop.xlane.xlu0 %1506
        %v1508 = vrcp.pop %v1504
        %v1509 = vmul.f32 %v1499, %v1508
        %v1510 = vrcp.pop %v1507
        %v1511 = vmul.f32 %v1501, %v1510
        %1512 = vrot.lane.b32.xlu0 %v985, 112
        %v1513 = vpop.permute.xlu0 %1512
        %1514 = vrot.lane.b32.xlu0 %v990, 112
        %v1515 = vpop.permute.xlu0 %1514
        %v1519 = vsel %vm1085, %v1509, 0
        %v1522 = vsel %vm1085, %v1511, 0
        %1524 = vmatprep.subr.mxu0 0.0
        %1525 = vmatpush1.msra.mxu0 %v1513
        %1526 = vmatprep.subr.mxu0 0.0
        %1527 = vmatpush1.msra.mxu0 %v1515
        %1528 = vmatprep.subr.mxu0 0.0
        %1529 = vmatpush1.msra.mxu0 0.0
        %1530 = vmatprep.subr.mxu0 0.0
        %1531 = vmatpush1.msra.mxu0 0.0
        %1532 = vmatprep.subr.mxu0 0.0
        %1533 = vmatpush1.msra.mxu0 0.0
        %1534 = vmatprep.subr.mxu0 0.0
        %1535 = vmatpush1.msra.mxu0 0.0
        %1536 = vmatprep.subr.mxu0 0.0
        %1537 = vmatpush1.msra.mxu0 0.0
        %1538 = vmatprep.subr.mxu0 0.0
        %1539 = vmatpush1.msra.mxu0 0.0
        %1540 = vmatprep.subr.mxu0 0.0
        %1541 = vmatpush1.msra.mxu0 0.0
        %1542 = vmatprep.subr.mxu0 0.0
        %1543 = vmatpush1.msra.mxu0 0.0
        %1544 = vmatprep.subr.mxu0 0.0
        %1545 = vmatpush1.msra.mxu0 0.0
        %1546 = vmatprep.subr.mxu0 0.0
        %1547 = vmatpush1.msra.mxu0 0.0
        %1548 = vmatprep.subr.mxu0 0.0
        %1549 = vmatpush1.msra.mxu0 0.0
        %1550 = vmatprep.subr.mxu0 0.0
        %1551 = vmatpush1.msra.mxu0 0.0
        %1552 = vmatprep.subr.mxu0 0.0
        %1553 = vmatpush1.msra.mxu0 0.0
        %1554 = vmatprep.subr.mxu0 0.0
        %1555 = vmatpush1.msra.mxu0 0.0
        %1556 = vmatprep.subr.mxu0 0.0
        %1557 = vmatpush1.msra.mxu0 0.0
        %1558 = vmatprep.subr.mxu0 0.0
        %1559 = vmatpush1.msra.mxu0 0.0
        %1560 = vmatprep.subr.mxu0 0.0
        %1561 = vmatpush1.msra.mxu0 0.0
        %1562 = vmatprep.subr.mxu0 0.0
        %1563 = vmatpush1.msra.mxu0 0.0
        %1564 = vmatprep.subr.mxu0 0.0
        %1565 = vmatpush1.msra.mxu0 0.0
        %1566 = vmatprep.subr.mxu0 0.0
        %1567 = vmatpush1.msra.mxu0 0.0
        %1568 = vmatprep.subr.mxu0 0.0
        %1569 = vmatpush1.msra.mxu0 0.0
        %1570 = vmatprep.subr.mxu0 0.0
        %1571 = vmatpush1.msra.mxu0 0.0
        %1572 = vmatprep.subr.mxu0 0.0
        %1573 = vmatpush1.msra.mxu0 0.0
        %1574 = vmatprep.subr.mxu0 0.0
        %1575 = vmatpush1.msra.mxu0 0.0
        %1576 = vmatprep.subr.mxu0 0.0
        %1577 = vmatpush1.msra.mxu0 0.0
        %1578 = vmatprep.subr.mxu0 0.0
        %1579 = vmatpush1.msra.mxu0 0.0
        %1580 = vmatprep.subr.mxu0 0.0
        %1581 = vmatpush1.msra.mxu0 0.0
        %1582 = vmatprep.subr.mxu0 0.0
        %1583 = vmatpush1.msra.mxu0 0.0
        %1584 = vmatprep.subr.mxu0 0.0
        %1585 = vmatpush1.msra.mxu0 0.0
        %1586 = vmatprep.subr.mxu0 0.0
        %1587 = vmatpush1.msra.mxu0 0.0
        %1588 = vmatprep.mubr.f32.mxu0 0.0
        %1589 = vmatmul.mubr.f32.gmra.mrb[0].mxu0 %v1519
        %v1590 = vpop.f32.mrb[0].mxu0
        %v1591 = vadd.f32 0.0, %v1590
        %v1592 = vpop.f32.mrb[0].mxu0
        %1593 = vmatprep.mubr.f32.mxu0 0.0
        %1594 = vmatmul.mubr.f32.gmra.mrb[0].mxu0 %v1522
        %v1595 = vpop.f32.mrb[0].mxu0
        %v1596 = vadd.f32 0.0, %v1595
        %v1597 = vpop.f32.mrb[0].mxu0
        %1598 = vdwg.mxu0
        %1599 = vrot.lane.b32.xlu0 %v807, 104
        %v1600 = vpop.permute.xlu0 %1599
        %1601 = vrot.lane.b32.xlu0 %v812, 104
        %v1602 = vpop.permute.xlu0 %1601
        %1603 = vrot.lane.b32.xlu0 %v893, 104
        %v1604 = vpop.permute.xlu0 %1603
        %1605 = vrot.lane.b32.xlu0 %v898, 104
        %v1606 = vpop.permute.xlu0 %1605
        %v1607 = vsel %vm993, %v1600, 0
        %v1609 = vsel %vm993, %v1602, 0
        %v1611 = vsel %vm993, %v1604, 0
        %v1613 = vsel %vm993, %v1606, 0
        %1615 = vmatprep.subr.mxu0 0.0
        %1616 = vmatpush1.xpose.msra.mxu0 %v1611
        %1617 = vmatprep.subr.mxu0 0.0
        %1618 = vmatpush1.xpose.msra.mxu0 %v1613
        %1619 = vmatprep.subr.mxu0 0.0
        %1620 = vmatpush1.xpose.msra.mxu0 0.0
        %1621 = vmatprep.subr.mxu0 0.0
        %1622 = vmatpush1.xpose.msra.mxu0 0.0
        %1623 = vmatprep.subr.mxu0 0.0
        %1624 = vmatpush1.xpose.msra.mxu0 0.0
        %1625 = vmatprep.subr.mxu0 0.0
        %1626 = vmatpush1.xpose.msra.mxu0 0.0
        %1627 = vmatprep.subr.mxu0 0.0
        %1628 = vmatpush1.xpose.msra.mxu0 0.0
        %1629 = vmatprep.subr.mxu0 0.0
        %1630 = vmatpush1.xpose.msra.mxu0 0.0
        %1631 = vmatprep.subr.mxu0 0.0
        %1632 = vmatpush1.xpose.msra.mxu0 0.0
        %1633 = vmatprep.subr.mxu0 0.0
        %1634 = vmatpush1.xpose.msra.mxu0 0.0
        %1635 = vmatprep.subr.mxu0 0.0
        %1636 = vmatpush1.xpose.msra.mxu0 0.0
        %1637 = vmatprep.subr.mxu0 0.0
        %1638 = vmatpush1.xpose.msra.mxu0 0.0
        %1639 = vmatprep.subr.mxu0 0.0
        %1640 = vmatpush1.xpose.msra.mxu0 0.0
        %1641 = vmatprep.subr.mxu0 0.0
        %1642 = vmatpush1.xpose.msra.mxu0 0.0
        %1643 = vmatprep.subr.mxu0 0.0
        %1644 = vmatpush1.xpose.msra.mxu0 0.0
        %1645 = vmatprep.subr.mxu0 0.0
        %1646 = vmatpush1.xpose.msra.mxu0 0.0
        %1647 = vmatprep.subr.mxu0 0.0
        %1648 = vmatpush1.xpose.msra.mxu0 0.0
        %1649 = vmatprep.subr.mxu0 0.0
        %1650 = vmatpush1.xpose.msra.mxu0 0.0
        %1651 = vmatprep.subr.mxu0 0.0
        %1652 = vmatpush1.xpose.msra.mxu0 0.0
        %1653 = vmatprep.subr.mxu0 0.0
        %1654 = vmatpush1.xpose.msra.mxu0 0.0
        %1655 = vmatprep.subr.mxu0 0.0
        %1656 = vmatpush1.xpose.msra.mxu0 0.0
        %1657 = vmatprep.subr.mxu0 0.0
        %1658 = vmatpush1.xpose.msra.mxu0 0.0
        %1659 = vmatprep.subr.mxu0 0.0
        %1660 = vmatpush1.xpose.msra.mxu0 0.0
        %1661 = vmatprep.subr.mxu0 0.0
        %1662 = vmatpush1.xpose.msra.mxu0 0.0
        %1663 = vmatprep.subr.mxu0 0.0
        %1664 = vmatpush1.xpose.msra.mxu0 0.0
        %1665 = vmatprep.subr.mxu0 0.0
        %1666 = vmatpush1.xpose.msra.mxu0 0.0
        %1667 = vmatprep.subr.mxu0 0.0
        %1668 = vmatpush1.xpose.msra.mxu0 0.0
        %1669 = vmatprep.subr.mxu0 0.0
        %1670 = vmatpush1.xpose.msra.mxu0 0.0
        %1671 = vmatprep.subr.mxu0 0.0
        %1672 = vmatpush1.xpose.msra.mxu0 0.0
        %1673 = vmatprep.subr.mxu0 0.0
        %1674 = vmatpush1.xpose.msra.mxu0 0.0
        %1675 = vmatprep.subr.mxu0 0.0
        %1676 = vmatpush1.xpose.msra.mxu0 0.0
        %1677 = vmatprep.subr.mxu0 0.0
        %1678 = vmatpush1.xpose.msra.mxu0 0.0
        %1679 = vmatprep.mubr.f32.mxu0 0.0
        %1680 = vmatmul.mubr.f32.gmra.mrb[0].mxu0 %v1607
        %v1681 = vpop.f32.mrb[0].mxu0
        %v1682 = vadd.f32 0.0, %v1681
        %v1683 = vpop.f32.mrb[0].mxu0
        %1684 = vmatprep.mubr.f32.mxu0 0.0
        %1685 = vmatmul.mubr.f32.gmra.mrb[0].mxu0 %v1609
        %v1686 = vpop.f32.mrb[0].mxu0
        %v1687 = vadd.f32 0.0, %v1686
        %v1688 = vpop.f32.mrb[0].mxu0
        %1689 = vdwg.mxu0
        %v1690 = vmul.f32 %v1682, 0.35355338
        %v1691 = vmul.f32 %v1687, 0.35355338
        %v1692 = vadd.f32 %v1690, %v718
        %v1693 = vadd.f32 %v1691, %v719
        %v1694 = vsel %vm1085, %v1692, -inf
        %1695 = vmax.xlane.f32.xlu0 %v1694
        %v1696 = vpop.xlane.xlu0 %1695
        %v1697 = vsel %vm1085, %v1693, -inf
        %1698 = vmax.xlane.f32.xlu0 %v1697
        %v1699 = vpop.xlane.xlu0 %1698
        %v1700 = vsub.f32 %v1692, %v1696
        %v1701 = vsub.f32 %v1693, %v1699
        %v1702 = vmul.f32 %v1700, 1.442695
        %v1703 = vpow.pop %v1702
        %v1704 = vmul.f32 %v1701, 1.442695
        %v1705 = vpow.pop %v1704
        %v1706 = vsel %vm1085, %v1703, 0.0
        %1707 = vadd.xlane.f32.xlu0 %v1706
        %v1708 = vpop.xlane.xlu0 %1707
        %v1709 = vsel %vm1085, %v1705, 0.0
        %1710 = vadd.xlane.f32.xlu0 %v1709
        %v1711 = vpop.xlane.xlu0 %1710
        %v1712 = vrcp.pop %v1708
        %v1713 = vmul.f32 %v1703, %v1712
        %v1714 = vrcp.pop %v1711
        %v1715 = vmul.f32 %v1705, %v1714
        %1716 = vrot.lane.b32.xlu0 %v985, 104
        %v1717 = vpop.permute.xlu0 %1716
        %1718 = vrot.lane.b32.xlu0 %v990, 104
        %v1719 = vpop.permute.xlu0 %1718
        %v1723 = vsel %vm1085, %v1713, 0
        %v1726 = vsel %vm1085, %v1715, 0
        %1728 = vmatprep.subr.mxu0 0.0
        %1729 = vmatpush1.msra.mxu0 %v1717
        %1730 = vmatprep.subr.mxu0 0.0
        %1731 = vmatpush1.msra.mxu0 %v1719
        %1732 = vmatprep.subr.mxu0 0.0
        %1733 = vmatpush1.msra.mxu0 0.0
        %1734 = vmatprep.subr.mxu0 0.0
        %1735 = vmatpush1.msra.mxu0 0.0
        %1736 = vmatprep.subr.mxu0 0.0
        %1737 = vmatpush1.msra.mxu0 0.0
        %1738 = vmatprep.subr.mxu0 0.0
        %1739 = vmatpush1.msra.mxu0 0.0
        %1740 = vmatprep.subr.mxu0 0.0
        %1741 = vmatpush1.msra.mxu0 0.0
        %1742 = vmatprep.subr.mxu0 0.0
        %1743 = vmatpush1.msra.mxu0 0.0
        %1744 = vmatprep.subr.mxu0 0.0
        %1745 = vmatpush1.msra.mxu0 0.0
        %1746 = vmatprep.subr.mxu0 0.0
        %1747 = vmatpush1.msra.mxu0 0.0
        %1748 = vmatprep.subr.mxu0 0.0
        %1749 = vmatpush1.msra.mxu0 0.0
        %1750 = vmatprep.subr.mxu0 0.0
        %1751 = vmatpush1.msra.mxu0 0.0
        %1752 = vmatprep.subr.mxu0 0.0
        %1753 = vmatpush1.msra.mxu0 0.0
        %1754 = vmatprep.subr.mxu0 0.0
        %1755 = vmatpush1.msra.mxu0 0.0
        %1756 = vmatprep.subr.mxu0 0.0
        %1757 = vmatpush1.msra.mxu0 0.0
        %1758 = vmatprep.subr.mxu0 0.0
        %1759 = vmatpush1.msra.mxu0 0.0
        %1760 = vmatprep.subr.mxu0 0.0
        %1761 = vmatpush1.msra.mxu0 0.0
        %1762 = vmatprep.subr.mxu0 0.0
        %1763 = vmatpush1.msra.mxu0 0.0
        %1764 = vmatprep.subr.mxu0 0.0
        %1765 = vmatpush1.msra.mxu0 0.0
        %1766 = vmatprep.subr.mxu0 0.0
        %1767 = vmatpush1.msra.mxu0 0.0
        %1768 = vmatprep.subr.mxu0 0.0
        %1769 = vmatpush1.msra.mxu0 0.0
        %1770 = vmatprep.subr.mxu0 0.0
        %1771 = vmatpush1.msra.mxu0 0.0
        %1772 = vmatprep.subr.mxu0 0.0
        %1773 = vmatpush1.msra.mxu0 0.0
        %1774 = vmatprep.subr.mxu0 0.0
        %1775 = vmatpush1.msra.mxu0 0.0
        %1776 = vmatprep.subr.mxu0 0.0
        %1777 = vmatpush1.msra.mxu0 0.0
        %1778 = vmatprep.subr.mxu0 0.0
        %1779 = vmatpush1.msra.mxu0 0.0
        %1780 = vmatprep.subr.mxu0 0.0
        %1781 = vmatpush1.msra.mxu0 0.0
        %1782 = vmatprep.subr.mxu0 0.0
        %1783 = vmatpush1.msra.mxu0 0.0
        %1784 = vmatprep.subr.mxu0 0.0
        %1785 = vmatpush1.msra.mxu0 0.0
        %1786 = vmatprep.subr.mxu0 0.0
        %1787 = vmatpush1.msra.mxu0 0.0
        %1788 = vmatprep.subr.mxu0 0.0
        %1789 = vmatpush1.msra.mxu0 0.0
        %1790 = vmatprep.subr.mxu0 0.0
        %1791 = vmatpush1.msra.mxu0 0.0
        %1792 = vmatprep.mubr.f32.mxu0 0.0
        %1793 = vmatmul.mubr.f32.gmra.mrb[0].mxu0 %v1723
        %v1794 = vpop.f32.mrb[0].mxu0
        %v1795 = vadd.f32 0.0, %v1794
        %v1796 = vpop.f32.mrb[0].mxu0
        %1797 = vmatprep.mubr.f32.mxu0 0.0
        %1798 = vmatmul.mubr.f32.gmra.mrb[0].mxu0 %v1726
        %v1799 = vpop.f32.mrb[0].mxu0
        %v1800 = vadd.f32 0.0, %v1799
        %v1801 = vpop.f32.mrb[0].mxu0
        %1802 = vdwg.mxu0
        %1805 = vrot.lane.b32.xlu0 %v1387, 8
        %v1806 = vpop.permute.xlu0 %1805
        %1807 = vrot.lane.b32.xlu0 %v1392, 8
        %v1808 = vpop.permute.xlu0 %1807
        %1813 = vrot.lane.b32.xlu0 %v1591, 16
        %v1814 = vpop.permute.xlu0 %1813
        %1815 = vrot.lane.b32.xlu0 %v1596, 16
        %v1816 = vpop.permute.xlu0 %1815
        %1821 = vrot.lane.b32.xlu0 %v1795, 24
        %v1822 = vpop.permute.xlu0 %1821
        %1823 = vrot.lane.b32.xlu0 %v1800, 24
        %v1824 = vpop.permute.xlu0 %1823
        %v1827 = vsel %vm993, %v1181, %v1806
        %v1828 = vsel %vm993, %v1186, %v1808
        %v1829 = vsel %vm1085, %v1827, %v1814
        %v1830 = vsel %vm1085, %v1828, %v1816
        %vm1831 = vcmask 195584
        %v1832 = vsel %vm1831, %v1829, %v1822
        %v1833 = vsel %vm1831, %v1830, %v1824
        %v1834 = vld [vmem:[#allocation8] sm:$0xff]
        %v1835 = vld [vmem:[#allocation8 + $0x8] sm:$0xff]
        %v1836 = vld [vmem:[#allocation8 + $0x10] sm:$0xff]
        %v1837 = vld [vmem:[#allocation8 + $0x18] sm:$0xff]
        %v1838 = vld [vmem:[%s10] sm:$0x1]
        %v1840 = vlaneseq
        %v1841 = vshrl.u32 %v1840, 7
        %v1842 = vsub.s32 0, %v1841
        %v1843 = vrot.slane %v1838, %v1842
        %v1846 = vsel %vm733, %v1832, 0
        %v1849 = vsel %vm733, %v1833, 0
        %1851 = vmatprep.subr.mxu0 0.0
        %1852 = vmatpush1.msra.mxu0 %v1834
        %1853 = vmatprep.subr.mxu0 0.0
        %1854 = vmatpush1.msra.mxu0 %v1835
        %1855 = vmatprep.subr.mxu0 0.0
        %1856 = vmatpush1.msra.mxu0 %v1836
        %1857 = vmatprep.subr.mxu0 0.0
        %1858 = vmatpush1.msra.mxu0 %v1837
        %1859 = vmatprep.subr.mxu0 0.0
        %1860 = vmatpush1.msra.mxu0 0.0
        %1861 = vmatprep.subr.mxu0 0.0
        %1862 = vmatpush1.msra.mxu0 0.0
        %1863 = vmatprep.subr.mxu0 0.0
        %1864 = vmatpush1.msra.mxu0 0.0
        %1865 = vmatprep.subr.mxu0 0.0
        %1866 = vmatpush1.msra.mxu0 0.0
        %1867 = vmatprep.subr.mxu0 0.0
        %1868 = vmatpush1.msra.mxu0 0.0
        %1869 = vmatprep.subr.mxu0 0.0
        %1870 = vmatpush1.msra.mxu0 0.0
        %1871 = vmatprep.subr.mxu0 0.0
        %1872 = vmatpush1.msra.mxu0 0.0
        %1873 = vmatprep.subr.mxu0 0.0
        %1874 = vmatpush1.msra.mxu0 0.0
        %1875 = vmatprep.subr.mxu0 0.0
        %1876 = vmatpush1.msra.mxu0 0.0
        %1877 = vmatprep.subr.mxu0 0.0
        %1878 = vmatpush1.msra.mxu0 0.0
        %1879 = vmatprep.subr.mxu0 0.0
        %1880 = vmatpush1.msra.mxu0 0.0
        %1881 = vmatprep.subr.mxu0 0.0
        %1882 = vmatpush1.msra.mxu0 0.0
        %1883 = vmatprep.subr.mxu0 0.0
        %1884 = vmatpush1.msra.mxu0 0.0
        %1885 = vmatprep.subr.mxu0 0.0
        %1886 = vmatpush1.msra.mxu0 0.0
        %1887 = vmatprep.subr.mxu0 0.0
        %1888 = vmatpush1.msra.mxu0 0.0
        %1889 = vmatprep.subr.mxu0 0.0
        %1890 = vmatpush1.msra.mxu0 0.0
        %1891 = vmatprep.subr.mxu0 0.0
        %1892 = vmatpush1.msra.mxu0 0.0
        %1893 = vmatprep.subr.mxu0 0.0
        %1894 = vmatpush1.msra.mxu0 0.0
        %1895 = vmatprep.subr.mxu0 0.0
        %1896 = vmatpush1.msra.mxu0 0.0
        %1897 = vmatprep.subr.mxu0 0.0
        %1898 = vmatpush1.msra.mxu0 0.0
        %1899 = vmatprep.subr.mxu0 0.0
        %1900 = vmatpush1.msra.mxu0 0.0
        %1901 = vmatprep.subr.mxu0 0.0
        %1902 = vmatpush1.msra.mxu0 0.0
        %1903 = vmatprep.subr.mxu0 0.0
        %1904 = vmatpush1.msra.mxu0 0.0
        %1905 = vmatprep.subr.mxu0 0.0
        %1906 = vmatpush1.msra.mxu0 0.0
        %1907 = vmatprep.subr.mxu0 0.0
        %1908 = vmatpush1.msra.mxu0 0.0
        %1909 = vmatprep.subr.mxu0 0.0
        %1910 = vmatpush1.msra.mxu0 0.0
        %1911 = vmatprep.subr.mxu0 0.0
        %1912 = vmatpush1.msra.mxu0 0.0
        %1913 = vmatprep.subr.mxu0 0.0
        %1914 = vmatpush1.msra.mxu0 0.0
        %1915 = vmatprep.mubr.f32.mxu0 0.0
        %1916 = vmatmul.mubr.f32.gmra.mrb[0].mxu0 %v1846
        %v1917 = vpop.f32.mrb[0].mxu0
        %v1918 = vadd.f32 %v1843, %v1917
        %v1919 = vpop.f32.mrb[0].mxu0
        %1920 = vmatprep.mubr.f32.mxu0 0.0
        %1921 = vmatmul.mubr.f32.gmra.mrb[0].mxu0 %v1849
        %v1922 = vpop.f32.mrb[0].mxu0
        %v1923 = vadd.f32 %v1843, %v1922
        %v1924 = vpop.f32.mrb[0].mxu0
        %1925 = vdwg.mxu0
        %v1926 = vadd.f32 %v714, %v1918
        %v1927 = vadd.f32 %v715, %v1923
        %v1928 = vsel %vm733, %v1926, 0.0
        %1929 = vadd.xlane.f32.xlu0 %v1928
        %v1930 = vpop.xlane.xlu0 %1929
        %v1931 = vsel %vm733, %v1927, 0.0
        %1932 = vadd.xlane.f32.xlu0 %v1931
        %v1933 = vpop.xlane.xlu0 %1932
        %v1934 = vrcp.pop 32.0
        %v1935 = vmul.f32 %v1930, %v1934
        %v1936 = vmul.f32 %v1933, %v1934
        %v1937 = vsub.f32 %v1926, %v1935
        %v1938 = vsub.f32 %v1927, %v1936
        %v1939 = vmul.f32 %v1937, %v1937
        %v1940 = vmul.f32 %v1938, %v1938
        %v1941 = vsel %vm733, %v1939, 0.0
        %1942 = vadd.xlane.f32.xlu0 %v1941
        %v1943 = vpop.xlane.xlu0 %1942
        %v1944 = vsel %vm733, %v1940, 0.0
        %1945 = vadd.xlane.f32.xlu0 %v1944
        %v1946 = vpop.xlane.xlu0 %1945
        %v1947 = vmul.f32 %v1943, %v1934
        %v1948 = vmul.f32 %v1946, %v1934
        %v1949 = vadd.f32 %v1947, 1e-05
        %v1950 = vadd.f32 %v1948, 1e-05
        %v1951 = vrsqrt.pop %v1949
        %v1952 = vrsqrt.pop %v1950
        %v1953 = vmul.f32 %v1937, %v1951
        %v1954 = vmul.f32 %v1938, %v1952
        %v1955 = vld [vmem:[%s15] sm:$0x1]
        %v1957 = vlaneseq
        %v1958 = vshrl.u32 %v1957, 7
        %v1959 = vsub.s32 0, %v1958
        %v1960 = vrot.slane %v1955, %v1959
        %v1962 = vmul.f32 %v1953, %v1960
        %v1963 = vmul.f32 %v1954, %v1960
        %v1964 = vld [vmem:[%s16] sm:$0x1]
        %v1966 = vlaneseq
        %v1967 = vshrl.u32 %v1966, 7
        %v1968 = vsub.s32 0, %v1967
        %v1969 = vrot.slane %v1964, %v1968
        %v1971 = vadd.f32 %v1962, %v1969
        %v1972 = vadd.f32 %v1963, %v1969
        %v1973 = vld [vmem:[#allocation10] sm:$0xff]
        %v1974 = vld [vmem:[#allocation10 + $0x8] sm:$0xff]
        %v1975 = vld [vmem:[#allocation10 + $0x10] sm:$0xff]
        %v1976 = vld [vmem:[#allocation10 + $0x18] sm:$0xff]
        %v1977 = vld [vmem:[%s12] sm:$0x1]
        %v1979 = vlaneseq
        %v1980 = vshrl.u32 %v1979, 7
        %v1981 = vsub.s32 0, %v1980
        %v1982 = vrot.slane %v1977, %v1981
        %v1985 = vsel %vm733, %v1971, 0
        %v1988 = vsel %vm733, %v1972, 0
        %1990 = vmatprep.subr.mxu0 0.0
        %1991 = vmatpush1.msra.mxu0 %v1973
        %1992 = vmatprep.subr.mxu0 0.0
        %1993 = vmatpush1.msra.mxu0 %v1974
        %1994 = vmatprep.subr.mxu0 0.0
        %1995 = vmatpush1.msra.mxu0 %v1975
        %1996 = vmatprep.subr.mxu0 0.0
        %1997 = vmatpush1.msra.mxu0 %v1976
        %1998 = vmatprep.subr.mxu0 0.0
        %1999 = vmatpush1.msra.mxu0 0.0
        %2000 = vmatprep.subr.mxu0 0.0
        %2001 = vmatpush1.msra.mxu0 0.0
        %2002 = vmatprep.subr.mxu0 0.0
        %2003 = vmatpush1.msra.mxu0 0.0
        %2004 = vmatprep.subr.mxu0 0.0
        %2005 = vmatpush1.msra.mxu0 0.0
        %2006 = vmatprep.subr.mxu0 0.0
        %2007 = vmatpush1.msra.mxu0 0.0
        %2008 = vmatprep.subr.mxu0 0.0
        %2009 = vmatpush1.msra.mxu0 0.0
        %2010 = vmatprep.subr.mxu0 0.0
        %2011 = vmatpush1.msra.mxu0 0.0
        %2012 = vmatprep.subr.mxu0 0.0
        %2013 = vmatpush1.msra.mxu0 0.0
        %2014 = vmatprep.subr.mxu0 0.0
        %2015 = vmatpush1.msra.mxu0 0.0
        %2016 = vmatprep.subr.mxu0 0.0
        %2017 = vmatpush1.msra.mxu0 0.0
        %2018 = vmatprep.subr.mxu0 0.0
        %2019 = vmatpush1.msra.mxu0 0.0
        %2020 = vmatprep.subr.mxu0 0.0
        %2021 = vmatpush1.msra.mxu0 0.0
        %2022 = vmatprep.subr.mxu0 0.0
        %2023 = vmatpush1.msra.mxu0 0.0
        %2024 = vmatprep.subr.mxu0 0.0
        %2025 = vmatpush1.msra.mxu0 0.0
        %2026 = vmatprep.subr.mxu0 0.0
        %2027 = vmatpush1.msra.mxu0 0.0
        %2028 = vmatprep.subr.mxu0 0.0
        %2029 = vmatpush1.msra.mxu0 0.0
        %2030 = vmatprep.subr.mxu0 0.0
        %2031 = vmatpush1.msra.mxu0 0.0
        %2032 = vmatprep.subr.mxu0 0.0
        %2033 = vmatpush1.msra.mxu0 0.0
        %2034 = vmatprep.subr.mxu0 0.0
        %2035 = vmatpush1.msra.mxu0 0.0
        %2036 = vmatprep.subr.mxu0 0.0
        %2037 = vmatpush1.msra.mxu0 0.0
        %2038 = vmatprep.subr.mxu0 0.0
        %2039 = vmatpush1.msra.mxu0 0.0
        %2040 = vmatprep.subr.mxu0 0.0
        %2041 = vmatpush1.msra.mxu0 0.0
        %2042 = vmatprep.subr.mxu0 0.0
        %2043 = vmatpush1.msra.mxu0 0.0
        %2044 = vmatprep.subr.mxu0 0.0
        %2045 = vmatpush1.msra.mxu0 0.0
        %2046 = vmatprep.subr.mxu0 0.0
        %2047 = vmatpush1.msra.mxu0 0.0
        %2048 = vmatprep.subr.mxu0 0.0
        %2049 = vmatpush1.msra.mxu0 0.0
        %2050 = vmatprep.subr.mxu0 0.0
        %2051 = vmatpush1.msra.mxu0 0.0
        %2052 = vmatprep.subr.mxu0 0.0
        %2053 = vmatpush1.msra.mxu0 0.0
        %2054 = vmatprep.mubr.f32.mxu0 0.0
        %2055 = vmatmul.mubr.f32.gmra.mrb[0].mxu0 %v1985
        %v2056 = vpop.f32.mrb[0].mxu0
        %v2057 = vadd.f32 %v1982, %v2056
        %v2058 = vpop.f32.mrb[0].mxu0
        %2059 = vmatprep.mubr.f32.mxu0 0.0
        %2060 = vmatmul.mubr.f32.gmra.mrb[0].mxu0 %v1988
        %v2061 = vpop.f32.mrb[0].mxu0
        %v2062 = vadd.f32 %v1982, %v2061
        %v2063 = vpop.f32.mrb[0].mxu0
        %2064 = vdwg.mxu0
        %v2065 = vmax.f32 %v2057, 0.0
        %v2066 = vmax.f32 %v2062, 0.0
        %v2067 = vld [vmem:[%s13] sm:$0xff]
        %v2068 = vld [vmem:[%s13 + $0x8] sm:$0xff]
        %v2069 = vld [vmem:[%s13 + $0x10] sm:$0xff]
        %v2070 = vld [vmem:[%s13 + $0x18] sm:$0xff]
        %v2071 = vld [vmem:[%s13 + $0x20] sm:$0xff]
        %v2072 = vld [vmem:[%s13 + $0x28] sm:$0xff]
        %v2073 = vld [vmem:[%s13 + $0x30] sm:$0xff]
        %v2074 = vld [vmem:[%s13 + $0x38] sm:$0xff]
        %v2075 = vld [vmem:[%s14] sm:$0x1]
        %v2077 = vlaneseq
        %v2078 = vshrl.u32 %v2077, 7
        %v2079 = vsub.s32 0, %v2078
        %v2080 = vrot.slane %v2075, %v2079
        %vm2082 = vcmask 523264
        %v2084 = vsel %vm2082, %v2065, 0
        %v2087 = vsel %vm2082, %v2066, 0
        %2089 = vmatprep.subr.mxu0 0.0
        %2090 = vmatpush1.msra.mxu0 %v2067
        %2091 = vmatprep.subr.mxu0 0.0
        %2092 = vmatpush1.msra.mxu0 %v2068
        %2093 = vmatprep.subr.mxu0 0.0
        %2094 = vmatpush1.msra.mxu0 %v2069
        %2095 = vmatprep.subr.mxu0 0.0
        %2096 = vmatpush1.msra.mxu0 %v2070
        %2097 = vmatprep.subr.mxu0 0.0
        %2098 = vmatpush1.msra.mxu0 %v2071
        %2099 = vmatprep.subr.mxu0 0.0
        %2100 = vmatpush1.msra.mxu0 %v2072
        %2101 = vmatprep.subr.mxu0 0.0
        %2102 = vmatpush1.msra.mxu0 %v2073
        %2103 = vmatprep.subr.mxu0 0.0
        %2104 = vmatpush1.msra.mxu0 %v2074
        %2105 = vmatprep.subr.mxu0 0.0
        %2106 = vmatpush1.msra.mxu0 0.0
        %2107 = vmatprep.subr.mxu0 0.0
        %2108 = vmatpush1.msra.mxu0 0.0
        %2109 = vmatprep.subr.mxu0 0.0
        %2110 = vmatpush1.msra.mxu0 0.0
        %2111 = vmatprep.subr.mxu0 0.0
        %2112 = vmatpush1.msra.mxu0 0.0
        %2113 = vmatprep.subr.mxu0 0.0
        %2114 = vmatpush1.msra.mxu0 0.0
        %2115 = vmatprep.subr.mxu0 0.0
        %2116 = vmatpush1.msra.mxu0 0.0
        %2117 = vmatprep.subr.mxu0 0.0
        %2118 = vmatpush1.msra.mxu0 0.0
        %2119 = vmatprep.subr.mxu0 0.0
        %2120 = vmatpush1.msra.mxu0 0.0
        %2121 = vmatprep.subr.mxu0 0.0
        %2122 = vmatpush1.msra.mxu0 0.0
        %2123 = vmatprep.subr.mxu0 0.0
        %2124 = vmatpush1.msra.mxu0 0.0
        %2125 = vmatprep.subr.mxu0 0.0
        %2126 = vmatpush1.msra.mxu0 0.0
        %2127 = vmatprep.subr.mxu0 0.0
        %2128 = vmatpush1.msra.mxu0 0.0
        %2129 = vmatprep.subr.mxu0 0.0
        %2130 = vmatpush1.msra.mxu0 0.0
        %2131 = vmatprep.subr.mxu0 0.0
        %2132 = vmatpush1.msra.mxu0 0.0
        %2133 = vmatprep.subr.mxu0 0.0
        %2134 = vmatpush1.msra.mxu0 0.0
        %2135 = vmatprep.subr.mxu0 0.0
        %2136 = vmatpush1.msra.mxu0 0.0
        %2137 = vmatprep.subr.mxu0 0.0
        %2138 = vmatpush1.msra.mxu0 0.0
        %2139 = vmatprep.subr.mxu0 0.0
        %2140 = vmatpush1.msra.mxu0 0.0
        %2141 = vmatprep.subr.mxu0 0.0
        %2142 = vmatpush1.msra.mxu0 0.0
        %2143 = vmatprep.subr.mxu0 0.0
        %2144 = vmatpush1.msra.mxu0 0.0
        %2145 = vmatprep.subr.mxu0 0.0
        %2146 = vmatpush1.msra.mxu0 0.0
        %2147 = vmatprep.subr.mxu0 0.0
        %2148 = vmatpush1.msra.mxu0 0.0
        %2149 = vmatprep.subr.mxu0 0.0
        %2150 = vmatpush1.msra.mxu0 0.0
        %2151 = vmatprep.subr.mxu0 0.0
        %2152 = vmatpush1.msra.mxu0 0.0
        %2153 = vmatprep.mubr.f32.mxu0 0.0
        %2154 = vmatmul.mubr.f32.gmra.mrb[0].mxu0 %v2084
        %v2155 = vpop.f32.mrb[0].mxu0
        %v2156 = vadd.f32 %v2080, %v2155
        %v2157 = vpop.f32.mrb[0].mxu0
        %2158 = vmatprep.mubr.f32.mxu0 0.0
        %2159 = vmatmul.mubr.f32.gmra.mrb[0].mxu0 %v2087
        %v2160 = vpop.f32.mrb[0].mxu0
        %v2161 = vadd.f32 %v2080, %v2160
        %v2162 = vpop.f32.mrb[0].mxu0
        %2163 = vdwg.mxu0
        %v2164 = vadd.f32 %v1971, %v2156
        %v2165 = vadd.f32 %v1972, %v2161
        %v2166 = vsel %vm733, %v2164, 0.0
        %2167 = vadd.xlane.f32.xlu0 %v2166
        %v2168 = vpop.xlane.xlu0 %2167
        %v2169 = vsel %vm733, %v2165, 0.0
        %2170 = vadd.xlane.f32.xlu0 %v2169
        %v2171 = vpop.xlane.xlu0 %2170
        %v2172 = vmul.f32 %v2168, %v1934
        %v2173 = vmul.f32 %v2171, %v1934
        %v2174 = vsub.f32 %v2164, %v2172
        %v2175 = vsub.f32 %v2165, %v2173
        %v2176 = vmul.f32 %v2174, %v2174
        %v2177 = vmul.f32 %v2175, %v2175
        %v2178 = vsel %vm733, %v2176, 0.0
        %2179 = vadd.xlane.f32.xlu0 %v2178
        %v2180 = vpop.xlane.xlu0 %2179
        %v2181 = vsel %vm733, %v2177, 0.0
        %2182 = vadd.xlane.f32.xlu0 %v2181
        %v2183 = vpop.xlane.xlu0 %2182
        %v2184 = vmul.f32 %v2180, %v1934
        %v2185 = vmul.f32 %v2183, %v1934
        %v2186 = vadd.f32 %v2184, 1e-05
        %v2187 = vadd.f32 %v2185, 1e-05
        %v2188 = vrsqrt.pop %v2186
        %v2189 = vrsqrt.pop %v2187
        %v2190 = vmul.f32 %v2174, %v2188
        %v2191 = vmul.f32 %v2175, %v2189
        %v2192 = vld [vmem:[%s17] sm:$0x1]
        %v2194 = vlaneseq
        %v2195 = vshrl.u32 %v2194, 7
        %v2196 = vsub.s32 0, %v2195
        %v2197 = vrot.slane %v2192, %v2196
        %v2199 = vmul.f32 %v2190, %v2197
        %v2200 = vmul.f32 %v2191, %v2197
        %v2201 = vld [vmem:[%s18] sm:$0x1]
        %v2203 = vlaneseq
        %v2204 = vshrl.u32 %v2203, 7
        %v2205 = vsub.s32 0, %v2204
        %v2206 = vrot.slane %v2201, %v2205
        %v2208 = vadd.f32 %v2199, %v2206
        %v2209 = vadd.f32 %v2200, %v2206
        %2210 = vst.msk [vmem:[%s698] sm:$0xff] %vm733, %v2208
        %2211 = vst.msk [vmem:[%s698 + $0x8] sm:$0xff] %vm733, %v2209
        %s2212 = sand.u32 %s458, 1
        %s2213 = scalar_lea.sflag [#allocation4], %s2212
        %s2214 = sand.u32 %s458, 1
        %s2215 = smul.addr %s2214, 16
        %s2216 = scalar_lea.vmem [#allocation11], %s2215
        // Predicated region
        $region117: #{tpu_custom_call.1} parent=95 // pred_check
          %p2217 = pneg %p468
        $region118: #{tpu_custom_call.1} parent=95 // pred_check_branch
          %2219 = sbr.rel (%p2217) target = $region120
        $region119: #{tpu_custom_call.1} parent=95 // pred_region
          %s2221 = ssub.s32 256, 256
          %2222 = vsyncadd %s2213, %s2221
          %s2223 = smul.addr %s36, 2
          %s2224 = smul.addr %s2223, 128
          %s2225 = scalar_lea.hbm %s19, %s2224
          %s2226 = sshll.u32 %s2216, 4
          %s2227 = int_to_ptr.vmem [resolvable:$true] %s2226
          %2232 = dma.vmem_to_hbm [thread:$0]  %s2227, 256, %s2225, %s2213, 128, 128, 8
        $region120: #{tpu_custom_call.1} parent=95 // pred_fallthru
          _
      $region96: #{tpu_custom_call.1} parent=5 // pred_fallthru
        _
      %p2233 = scmp.le.s32.totalorder 2, %s31
      // Predicated region
      $region121: #{tpu_custom_call.1} parent=5 // pred_check
        %p2234 = pneg %p2233
      $region122: #{tpu_custom_call.1} parent=5 // pred_check_branch
        %2236 = sbr.rel (%p2234) target = $region124
      $region123: #{tpu_custom_call.1} parent=5 // pred_region
        %s2237 = ssub.s32 %s31, 2
        // Predicated region
        $region125: #{tpu_custom_call.1} parent=123 // pred_check
          %p2238 = pneg %p474
        $region126: #{tpu_custom_call.1} parent=123 // pred_check_branch
          %2240 = sbr.rel (%p2238) target = $region128
        $region127: #{tpu_custom_call.1} parent=123 // pred_region
          %s2241 = sand.u32 %s459, 1
          %s2242 = scalar_lea.sflag [#allocation4], %s2241
          %s2243 = sand.u32 %s459, 1
          %s2244 = smul.addr %s2243, 16
          %s2245 = scalar_lea.vmem [#allocation11], %s2244
          %2246 = dma.done %s2242, 256
        $region128: #{tpu_custom_call.1} parent=123 // pred_fallthru
          _
      $region124: #{tpu_custom_call.1} parent=5 // pred_fallthru
        _
    $region6: #{tpu_custom_call.1} parent=1 // loop_footer
      %s35 = sadd.s32 1, %s31
    $region7: #{tpu_custom_call.1} parent=1 // loop_footer_branch
      %30 = sbr.rel target = $region3
    $region8: #{tpu_custom_call.1} parent=1 // loop_exit
      _
    %2247 = vsyncpa [#allocation3], 1
    %s2248 = scalar_lea.sflag [#allocation3], 1
    %2249 = vsyncpa %s2248, 1
    %2250 = vsyncpa [#allocation6], 1
    %2251 = vsyncpa [#allocation9], 1
    %2252 = vsyncpa [#allocation4], 1
    %s2253 = scalar_lea.sflag [#allocation4], 1
    %2254 = vsyncpa %s2253, 1

</llo_original>
